<compile_context>
chip_gen: v5e
topology: v5e:2x2
jax: 0.10.0
libtpu: 0.0.40
codegen_flags: <defaults>
</compile_context>

<pallas_src>
import functools
import math

import jax
import jax.numpy as jnp
from jax.experimental import pallas as pl
from jax.experimental.pallas import tpu as pltpu


def _gat_kernel(*refs, heads, head_dim, mxu_dtype, softmax_dtype, dst_tiled):
    # refs (dst_tiled):     xs, xd, adjt, w_aug, sb, bias, out
    # refs (not dst_tiled): xs,     adjt, w_aug, sb, bias, out
    #   xs_ref:   (TB, S, D)   full source rows of the batch block
    #   xd_ref:   (TB, TJ, D)  dst-tile rows (only when dst_tiled)
    #   adjt_ref: (TB, TJ, S)  int8 transposed edge mask: adjt[j, i] = (A[i,j]==1)
    #   w_ref:    (D, D+2H)    [W | W @ att_all]        (mxu_dtype)
    #   sb_ref:   (1, D+2H)    [b_proj | b_proj @ att_all]   (f32)
    #   bias_ref: (1, D)       output bias (f32)
    #   out_ref:  (TB, TJ, D)
    if dst_tiled:
        xs_ref, xd_ref, adjt_ref, w_ref, sb_ref, bias_ref, out_ref = refs
    else:
        xs_ref, adjt_ref, w_ref, sb_ref, bias_ref, out_ref = refs
        xd_ref = None

    TB, S, D = xs_ref.shape
    TJ = adjt_ref.shape[1]
    H = heads
    hd = head_dim

    # ---- fused projection + score matmul (single MXU pass, big M) ----------
    xs_flat = xs_ref[...].reshape(TB * S, D).astype(mxu_dtype)
    if dst_tiled:
        xd_flat = xd_ref[...].reshape(TB * TJ, D).astype(mxu_dtype)
        x_all = jnp.concatenate([xs_flat, xd_flat], axis=0)
    else:
        x_all = xs_flat
    proj = jnp.dot(x_all, w_ref[...], preferred_element_type=jnp.float32)
    proj = proj + sb_ref[...]                              # (rows, D+2H) f32
    ns = TB * S
    proj_s = proj[:ns]                                     # src rows
    proj_d = proj[ns:] if dst_tiled else proj_s            # dst rows

    # bf16 cast of projected src features hoisted out of the head loop
    xsrc_mxu = proj_s[:, :D].astype(mxu_dtype)             # (TB*S, D)

    for b in range(TB):                                    # unrolled, TB small
        ps = proj_s[b * S:(b + 1) * S]                     # (S, D+2H)
        pd = proj_d[b * TJ:(b + 1) * TJ]                   # (TJ, D+2H)
        xb = xsrc_mxu[b * S:(b + 1) * S]                   # (S, D) mxu dtype
        src_rows = ps[:, D:D + H].T.astype(softmax_dtype)  # (H, S)
        dst_cols = pd[:, D + H:D + 2 * H].astype(softmax_dtype)  # (TJ, H)
        edge = adjt_ref[b] != 0                            # (TJ, S) dst-major

        head_outs = []
        denoms = []
        for h in range(H):                                 # unrolled
            # e[j, i] = <x_j, att_dst_h> + <x_i, att_src_h>
            e = dst_cols[:, h:h + 1] + src_rows[h:h + 1, :]      # (TJ, S)
            # masked_fill((A != 1), 0) THEN leaky_relu(0.2): matches the torch
            # module exactly (non-edges keep weight exp(-max) — intentional,
            # non-standard GAT semantics; do not "fix" to -inf).
            e = jnp.where(edge, e, 0.0)
            e = jnp.maximum(e, 0.2 * e)                    # leaky relu, slope<1
            m = jnp.max(e, axis=-1, keepdims=True)         # (TJ, 1) over src
            p = jnp.exp(e - m)                             # UNnormalized probs
            denoms.append(
                jnp.sum(p, axis=-1, keepdims=True).astype(jnp.float32))
            p_mm = p if p.dtype == mxu_dtype else p.astype(mxu_dtype)
            head_outs.append(
                jnp.dot(p_mm, xb[:, h * hd:(h + 1) * hd],
                        preferred_element_type=jnp.float32))     # (TJ, hd)

        # One lane-dense normalization of the concatenated result: a single
        # EUP reciprocal on the (TJ, H) denominators, per-head columns
        # broadcast to head_dim lanes, one (TJ, D) multiply.
        out_b = jnp.concatenate(head_outs, axis=-1)              # (TJ, D)
        inv = pl.reciprocal(jnp.concatenate(denoms, axis=-1), approx=True)
        scale = jnp.concatenate(
            [jnp.broadcast_to(inv[:, h:h + 1], (TJ, hd)) for h in range(H)],
            axis=-1)                                             # (TJ, D)
        # single lane-dense store; folds self-loop (+xp) and output bias
        out_ref[b, :, :] = (out_b * scale + pd[:, :D]
                            + bias_ref[...]).astype(out_ref.dtype)


def _pick_dst_block(S, max_rows=512):
    """Largest dst tile (multiple of 8 sublanes, dividing S) at most max_rows."""
    if S <= max_rows:
        return S
    t = (max_rows // 8) * 8
    while t >= 8:
        if S % t == 0:
            return t
        t -= 8
    return S


def _pick_batch_block(B, n_dst_tiles, cap=8):
    """Largest batch block dividing B that still leaves >= 2 grid steps
    (so both v7x TensorCores get work) whenever that is possible."""
    floor_steps = min(2, B * n_dst_tiles)
    best = 1
    for tb in range(1, min(B, cap) + 1):
        if B % tb == 0 and (B // tb) * n_dst_tiles >= floor_steps:
            best = tb
    return best


def _default_vmem_limit():
    # ~48 MiB on v7x (64 MiB physical), ~96 MiB on v5e/v6e (128 MiB physical).
    try:
        cap = pltpu.get_tpu_info().vmem_capacity_bytes
        return int(min(cap * 3 // 4, 96 * 1024 * 1024))
    except Exception:
        return 48 * 1024 * 1024


def _default_softmax_dtype():
    # bf16 element-wise / exp only where the VPU/EUP are natively bf16.
    try:
        kind = jax.devices()[0].device_kind.lower()
        if ("v6" in kind) or ("v7" in kind) or ("tpu7" in kind):
            return jnp.bfloat16
    except Exception:
        pass
    return jnp.float32


def gat_forward(x, A, W, b_proj, att_src, att_dst, bias, *, heads,
                mxu_dtype=jnp.bfloat16, softmax_dtype=None,
                batch_block=None, dst_block=None, vmem_limit_bytes=None):
    B, S, D = x.shape
    hd = D // heads
    assert heads * hd == D

    if softmax_dtype is None:
        softmax_dtype = _default_softmax_dtype()
    if vmem_limit_bytes is None:
        vmem_limit_bytes = _default_vmem_limit()

    # int8 transposed edge mask (4x less adjacency DMA; `!= 0` test in-kernel)
    adj_t = (jnp.swapaxes(A, 1, 2) == 1.0).astype(jnp.int8)

    # Block-structured per-head attention vectors, folded into the projection:
    # W_aug = [W | W @ att_all],  sb = [b_proj | b_proj @ att_all], so a single
    # x @ W_aug yields both xp (cols :D) and all per-head scores (cols D:).
    att_all = jnp.zeros((D, 2 * heads), jnp.float32)
    for h in range(heads):
        att_all = att_all.at[h * hd:(h + 1) * hd, h].set(att_src[h])
        att_all = att_all.at[h * hd:(h + 1) * hd, heads + h].set(att_dst[h])
    w_aug = jnp.concatenate([W, W @ att_all], axis=1).astype(mxu_dtype)
    sb = jnp.concatenate([b_proj, b_proj @ att_all], axis=1)   # (1, D+2H) f32

    # ---- tiling -------------------------------------------------------------
    tj = dst_block if dst_block is not None else _pick_dst_block(S)
    assert S % tj == 0 and (tj == S or tj % 8 == 0)
    n_dst = S // tj
    dst_tiled = n_dst > 1
    tb = batch_block if batch_block is not None else _pick_batch_block(B, n_dst)
    assert B % tb == 0
    grid = (B // tb, n_dst)

    kernel = functools.partial(
        _gat_kernel, heads=heads, head_dim=hd, mxu_dtype=mxu_dtype,
        softmax_dtype=softmax_dtype, dst_tiled=dst_tiled)

    def build_and_call(use_single_buffer):
        def const_spec(shape):
            if use_single_buffer:
                return pl.BlockSpec(shape, lambda b, j: (0,) * len(shape),
                                    pipeline_mode=pl.Buffered(1))
            return pl.BlockSpec(shape, lambda b, j: (0,) * len(shape))

        in_specs = [pl.BlockSpec((tb, S, D), lambda b, j: (b, 0, 0))]  # x (src)
        operands = [x]
        if dst_tiled:
            in_specs.append(
                pl.BlockSpec((tb, tj, D), lambda b, j: (b, j, 0)))     # x (dst)
            operands.append(x)
        in_specs += [
            pl.BlockSpec((tb, tj, S), lambda b, j: (b, j, 0)),         # A^T int8
            const_spec((D, D + 2 * heads)),                            # W_aug
            const_spec((1, D + 2 * heads)),                            # fused b
            const_spec((1, D)),                                        # out bias
        ]
        operands += [adj_t, w_aug, sb, bias]

        return pl.pallas_call(
            kernel,
            out_shape=jax.ShapeDtypeStruct((B, S, D), x.dtype),
            grid=grid,
            in_specs=in_specs,
            out_specs=pl.BlockSpec((tb, tj, D), lambda b, j: (b, j, 0)),
            compiler_params=pltpu.CompilerParams(
                dimension_semantics=("parallel", "parallel"),
                vmem_limit_bytes=vmem_limit_bytes),
        )(*operands)

    if hasattr(pl, "Buffered"):
        try:
            return build_and_call(True)
        except Exception:
            # pipeline_mode=pl.Buffered(1) not supported by this jax/Mosaic
            # version -- fall back to default double buffering.
            pass
    return build_and_call(False)


def gat_reference(x, A, W, b_proj, att_src, att_dst, bias, *, heads,
                  mxu_dtype=jnp.float32):
    """Pure-JAX transcription of the PyTorch forward (mask=None, eval mode).

    `mxu_dtype` mirrors the kernel's matmul-operand precision (bf16 rounding,
    f32 accumulation); element-wise / softmax math stays f32.
    """
    B, S, D = x.shape
    hd = D // heads
    xp = jnp.einsum('bsd,de->bse', x.astype(mxu_dtype), W.astype(mxu_dtype),
                    preferred_element_type=jnp.float32) + b_proj
    xh = xp.reshape(B, S, heads, hd)
    a_src = (xh * att_src.reshape(1, 1, heads, hd)).sum(-1)      # (B,S,H)
    a_dst = (xh * att_dst.reshape(1, 1, heads, hd)).sum(-1)      # (B,S,H)
    alpha = a_src[:, :, None, :] + a_dst[:, None, :, :]          # (B,S,S,H)
    alpha = jnp.where((A != 1.0)[..., None], 0.0, alpha)
    alpha = jnp.where(alpha > 0, alpha, 0.2 * alpha)             # leaky relu
    alpha = jax.nn.softmax(alpha, axis=1)                        # over src
    xh_r = xh.astype(mxu_dtype).astype(jnp.float32)              # mirror MXU cast
    out = jnp.einsum('bijh,bihd->bjhd', alpha, xh_r)             # (B,S,H,hd)
    out = out.reshape(B, S, D) + xp + bias                       # self-loop+bias
    return out


if __name__ == "__main__":
    def run_case(B, S, D, HEADS, key, **kw):
        HD = D // HEADS
        stdv = 1.0 / math.sqrt(HD)
        k_w, k_src, k_dst, k_x, k_a = jax.random.split(key, 5)

        # deterministic parameter init (mirrors reset_parameters())
        W = jax.random.uniform(k_w, (D, D), jnp.float32, -stdv, stdv)
        b_proj = jnp.zeros((1, D), jnp.float32)                  # proj bias = 0
        att_src = jax.random.uniform(k_src, (HEADS, HD), jnp.float32, -stdv, stdv)
        att_dst = jax.random.uniform(k_dst, (HEADS, HD), jnp.float32, -stdv, stdv)
        bias = jnp.zeros((1, D), jnp.float32)                    # out bias = 0

        x = jax.random.normal(k_x, (B, S, D), jnp.float32)
        A = (jax.random.uniform(k_a, (B, S, S)) < 0.5).astype(jnp.float32)
        A = jnp.maximum(A, jnp.eye(S, dtype=jnp.float32)[None])  # self edges

        out = gat_forward(x, A, W, b_proj, att_src, att_dst, bias,
                          heads=HEADS, **kw)
        out = jax.block_until_ready(out)

        # reference with matching bf16 matmul-operand rounding (f32 accum);
        # remaining deltas: fused score matmul, bf16 softmax chain (v6e/v7x),
        # approx reciprocal, accumulation order.
        ref = gat_reference(x, A, W, b_proj, att_src, att_dst, bias,
                            heads=HEADS, mxu_dtype=jnp.bfloat16)
        err = float(jnp.max(jnp.abs(out - ref) / (1.0 + jnp.abs(ref))))
        assert err < 5e-2, f"scaled max error {err} (B={B}, S={S})"

    key = jax.random.PRNGKey(0)
    k1, k2 = jax.random.split(key)
    # single dst tile (grid has >= 2 parallel steps across the batch)
    run_case(2, 8, 32, 4, k1)
    # exercises the dst-tile grid axis (grid = (1, 2), dst tiles of 8 rows)
    run_case(2, 16, 32, 4, k2, dst_block=8)
    print("KERNEL_OK")
</pallas_src>

<mosaic_0001>
module attributes {stable_mosaic.version = 11 : i64} {
  func.func @_gat_kernel(%arg0: i32, %arg1: i32, %arg2: memref<1x8x32xf32, #tpu.memory_space<vmem>>, %arg3: memref<1x8x8xi8, #tpu.memory_space<vmem>>, %arg4: memref<32x40xbf16, #tpu.memory_space<vmem>>, %arg5: memref<1x40xf32, #tpu.memory_space<vmem>>, %arg6: memref<1x32xf32, #tpu.memory_space<vmem>>, %arg7: memref<1x8x32xf32, #tpu.memory_space<vmem>>) attributes {dimension_semantics = [#tpu.dimension_semantics<parallel>, #tpu.dimension_semantics<parallel>], iteration_bounds = array<i64: 2, 1>, scalar_prefetch = 0 : i64, scratch_operands = 0 : i64, tpu.core_type = #tpu.core_type<tc>, window_params = [{transform_indices = @transform_0, window_bounds = array<i64: 1, 8, 32>}, {transform_indices = @transform_1, window_bounds = array<i64: 1, 8, 8>}, {pipeline_mode = #tpu.pipeline_mode<synchronous>, transform_indices = @transform_2, window_bounds = array<i64: 32, 40>}, {pipeline_mode = #tpu.pipeline_mode<synchronous>, transform_indices = @transform_3, window_bounds = array<i64: 1, 40>}, {pipeline_mode = #tpu.pipeline_mode<synchronous>, transform_indices = @transform_4, window_bounds = array<i64: 1, 32>}, {transform_indices = @transform_5, window_bounds = array<i64: 1, 8, 32>}]} {
    %c0 = arith.constant 0 : index
    %c0_0 = arith.constant 0 : index
    %c0_1 = arith.constant 0 : index
    %0 = vector.load %arg2[%c0, %c0_0, %c0_1] : memref<1x8x32xf32, #tpu.memory_space<vmem>>, vector<1x8x32xf32>
    %1 = vector.shape_cast %0 : vector<1x8x32xf32> to vector<8x32xf32>
    %2 = arith.truncf %1 : vector<8x32xf32> to vector<8x32xbf16>
    %c0_2 = arith.constant 0 : index
    %c0_3 = arith.constant 0 : index
    %3 = vector.load %arg4[%c0_2, %c0_3] : memref<32x40xbf16, #tpu.memory_space<vmem>>, vector<32x40xbf16>
    %cst = arith.constant dense<0.000000e+00> : vector<8x40xf32>
    %4 = tpu.matmul %2, %3, %cst {dimension_numbers = #tpu.dot_dimension_numbers<[1], [0], [0], [1], [0, 0, 1, 1], [], []>} : vector<8x32xbf16>, vector<32x40xbf16>, vector<8x40xf32> -> vector<8x40xf32>
    %c0_4 = arith.constant 0 : index
    %c0_5 = arith.constant 0 : index
    %5 = vector.load %arg5[%c0_4, %c0_5] : memref<1x40xf32, #tpu.memory_space<vmem>>, vector<1x40xf32>
    %6 = vector.broadcast %5 : vector<1x40xf32> to vector<8x40xf32>
    %7 = arith.addf %4, %6 : vector<8x40xf32>
    %8 = vector.extract_strided_slice %7 {offsets = [0, 0], sizes = [8, 32], strides = [1, 1]} : vector<8x40xf32> to vector<8x32xf32>
    %9 = arith.truncf %8 : vector<8x32xf32> to vector<8x32xbf16>
    %10 = vector.extract_strided_slice %7 {offsets = [0, 32], sizes = [8, 4], strides = [1, 1]} : vector<8x40xf32> to vector<8x4xf32>
    %11 = tpu.transpose %10, [1, 0] : vector<8x4xf32> -> vector<4x8xf32>
    %12 = vector.extract_strided_slice %7 {offsets = [0, 36], sizes = [8, 4], strides = [1, 1]} : vector<8x40xf32> to vector<8x4xf32>
    %c0_6 = arith.constant 0 : index
    %c0_7 = arith.constant 0 : index
    %c0_8 = arith.constant 0 : index
    %13 = vector.load %arg3[%c0_6, %c0_7, %c0_8] : memref<1x8x8xi8, #tpu.memory_space<vmem>>, vector<1x8x8xi8>
    %14 = vector.shape_cast %13 : vector<1x8x8xi8> to vector<8x8xi8>
    %c0_i8 = arith.constant 0 : i8
    %15 = vector.broadcast %c0_i8 : i8 to vector<8x8xi8>
    %16 = arith.cmpi ne, %14, %15 : vector<8x8xi8>
    %17 = vector.extract_strided_slice %12 {offsets = [0, 0], sizes = [8, 1], strides = [1, 1]} : vector<8x4xf32> to vector<8x1xf32>
    %18 = vector.extract_strided_slice %11 {offsets = [0, 0], sizes = [1, 8], strides = [1, 1]} : vector<4x8xf32> to vector<1x8xf32>
    %19 = vector.broadcast %17 : vector<8x1xf32> to vector<8x8xf32>
    %20 = vector.broadcast %18 : vector<1x8xf32> to vector<8x8xf32>
    %21 = arith.addf %19, %20 : vector<8x8xf32>
    %cst_9 = arith.constant 0.000000e+00 : f32
    %22 = vector.broadcast %cst_9 : f32 to vector<8x8xf32>
    %23 = arith.select %16, %21, %22 : vector<8x8xi1>, vector<8x8xf32>
    %cst_10 = arith.constant 2.000000e-01 : f32
    %24 = vector.broadcast %cst_10 : f32 to vector<8x8xf32>
    %25 = arith.mulf %24, %23 : vector<8x8xf32>
    %26 = arith.maximumf %23, %25 : vector<8x8xf32>
    %cst_11 = arith.constant dense<0xFF800000> : vector<8xf32>
    %27 = vector.multi_reduction <maximumf>, %26, %cst_11 [1] : vector<8x8xf32> to vector<8xf32>
    %28 = vector.shape_cast %27 : vector<8xf32> to vector<8x1xf32>
    %29 = vector.broadcast %28 : vector<8x1xf32> to vector<8x8xf32>
    %30 = arith.subf %26, %29 : vector<8x8xf32>
    %31 = math.exp %30 : vector<8x8xf32>
    %cst_12 = arith.constant dense<0.000000e+00> : vector<8xf32>
    %32 = vector.multi_reduction <add>, %31, %cst_12 [1] : vector<8x8xf32> to vector<8xf32>
    %33 = vector.shape_cast %32 : vector<8xf32> to vector<8x1xf32>
    %34 = arith.truncf %31 : vector<8x8xf32> to vector<8x8xbf16>
    %35 = vector.extract_strided_slice %9 {offsets = [0, 0], sizes = [8, 8], strides = [1, 1]} : vector<8x32xbf16> to vector<8x8xbf16>
    %cst_13 = arith.constant dense<0.000000e+00> : vector<8x8xf32>
    %36 = tpu.matmul %34, %35, %cst_13 {dimension_numbers = #tpu.dot_dimension_numbers<[1], [0], [0], [1], [0, 0, 1, 1], [], []>} : vector<8x8xbf16>, vector<8x8xbf16>, vector<8x8xf32> -> vector<8x8xf32>
    %37 = vector.extract_strided_slice %12 {offsets = [0, 1], sizes = [8, 1], strides = [1, 1]} : vector<8x4xf32> to vector<8x1xf32>
    %38 = vector.extract_strided_slice %11 {offsets = [1, 0], sizes = [1, 8], strides = [1, 1]} : vector<4x8xf32> to vector<1x8xf32>
    %39 = vector.broadcast %37 : vector<8x1xf32> to vector<8x8xf32>
    %40 = vector.broadcast %38 : vector<1x8xf32> to vector<8x8xf32>
    %41 = arith.addf %39, %40 : vector<8x8xf32>
    %cst_14 = arith.constant 0.000000e+00 : f32
    %42 = vector.broadcast %cst_14 : f32 to vector<8x8xf32>
    %43 = arith.select %16, %41, %42 : vector<8x8xi1>, vector<8x8xf32>
    %cst_15 = arith.constant 2.000000e-01 : f32
    %44 = vector.broadcast %cst_15 : f32 to vector<8x8xf32>
    %45 = arith.mulf %44, %43 : vector<8x8xf32>
    %46 = arith.maximumf %43, %45 : vector<8x8xf32>
    %cst_16 = arith.constant dense<0xFF800000> : vector<8xf32>
    %47 = vector.multi_reduction <maximumf>, %46, %cst_16 [1] : vector<8x8xf32> to vector<8xf32>
    %48 = vector.shape_cast %47 : vector<8xf32> to vector<8x1xf32>
    %49 = vector.broadcast %48 : vector<8x1xf32> to vector<8x8xf32>
    %50 = arith.subf %46, %49 : vector<8x8xf32>
    %51 = math.exp %50 : vector<8x8xf32>
    %cst_17 = arith.constant dense<0.000000e+00> : vector<8xf32>
    %52 = vector.multi_reduction <add>, %51, %cst_17 [1] : vector<8x8xf32> to vector<8xf32>
    %53 = vector.shape_cast %52 : vector<8xf32> to vector<8x1xf32>
    %54 = arith.truncf %51 : vector<8x8xf32> to vector<8x8xbf16>
    %55 = vector.extract_strided_slice %9 {offsets = [0, 8], sizes = [8, 8], strides = [1, 1]} : vector<8x32xbf16> to vector<8x8xbf16>
    %cst_18 = arith.constant dense<0.000000e+00> : vector<8x8xf32>
    %56 = tpu.matmul %54, %55, %cst_18 {dimension_numbers = #tpu.dot_dimension_numbers<[1], [0], [0], [1], [0, 0, 1, 1], [], []>} : vector<8x8xbf16>, vector<8x8xbf16>, vector<8x8xf32> -> vector<8x8xf32>
    %57 = vector.extract_strided_slice %12 {offsets = [0, 2], sizes = [8, 1], strides = [1, 1]} : vector<8x4xf32> to vector<8x1xf32>
    %58 = vector.extract_strided_slice %11 {offsets = [2, 0], sizes = [1, 8], strides = [1, 1]} : vector<4x8xf32> to vector<1x8xf32>
    %59 = vector.broadcast %57 : vector<8x1xf32> to vector<8x8xf32>
    %60 = vector.broadcast %58 : vector<1x8xf32> to vector<8x8xf32>
    %61 = arith.addf %59, %60 : vector<8x8xf32>
    %cst_19 = arith.constant 0.000000e+00 : f32
    %62 = vector.broadcast %cst_19 : f32 to vector<8x8xf32>
    %63 = arith.select %16, %61, %62 : vector<8x8xi1>, vector<8x8xf32>
    %cst_20 = arith.constant 2.000000e-01 : f32
    %64 = vector.broadcast %cst_20 : f32 to vector<8x8xf32>
    %65 = arith.mulf %64, %63 : vector<8x8xf32>
    %66 = arith.maximumf %63, %65 : vector<8x8xf32>
    %cst_21 = arith.constant dense<0xFF800000> : vector<8xf32>
    %67 = vector.multi_reduction <maximumf>, %66, %cst_21 [1] : vector<8x8xf32> to vector<8xf32>
    %68 = vector.shape_cast %67 : vector<8xf32> to vector<8x1xf32>
    %69 = vector.broadcast %68 : vector<8x1xf32> to vector<8x8xf32>
    %70 = arith.subf %66, %69 : vector<8x8xf32>
    %71 = math.exp %70 : vector<8x8xf32>
    %cst_22 = arith.constant dense<0.000000e+00> : vector<8xf32>
    %72 = vector.multi_reduction <add>, %71, %cst_22 [1] : vector<8x8xf32> to vector<8xf32>
    %73 = vector.shape_cast %72 : vector<8xf32> to vector<8x1xf32>
    %74 = arith.truncf %71 : vector<8x8xf32> to vector<8x8xbf16>
    %75 = vector.extract_strided_slice %9 {offsets = [0, 16], sizes = [8, 8], strides = [1, 1]} : vector<8x32xbf16> to vector<8x8xbf16>
    %cst_23 = arith.constant dense<0.000000e+00> : vector<8x8xf32>
    %76 = tpu.matmul %74, %75, %cst_23 {dimension_numbers = #tpu.dot_dimension_numbers<[1], [0], [0], [1], [0, 0, 1, 1], [], []>} : vector<8x8xbf16>, vector<8x8xbf16>, vector<8x8xf32> -> vector<8x8xf32>
    %77 = vector.extract_strided_slice %12 {offsets = [0, 3], sizes = [8, 1], strides = [1, 1]} : vector<8x4xf32> to vector<8x1xf32>
    %78 = vector.extract_strided_slice %11 {offsets = [3, 0], sizes = [1, 8], strides = [1, 1]} : vector<4x8xf32> to vector<1x8xf32>
    %79 = vector.broadcast %77 : vector<8x1xf32> to vector<8x8xf32>
    %80 = vector.broadcast %78 : vector<1x8xf32> to vector<8x8xf32>
    %81 = arith.addf %79, %80 : vector<8x8xf32>
    %cst_24 = arith.constant 0.000000e+00 : f32
    %82 = vector.broadcast %cst_24 : f32 to vector<8x8xf32>
    %83 = arith.select %16, %81, %82 : vector<8x8xi1>, vector<8x8xf32>
    %cst_25 = arith.constant 2.000000e-01 : f32
    %84 = vector.broadcast %cst_25 : f32 to vector<8x8xf32>
    %85 = arith.mulf %84, %83 : vector<8x8xf32>
    %86 = arith.maximumf %83, %85 : vector<8x8xf32>
    %cst_26 = arith.constant dense<0xFF800000> : vector<8xf32>
    %87 = vector.multi_reduction <maximumf>, %86, %cst_26 [1] : vector<8x8xf32> to vector<8xf32>
    %88 = vector.shape_cast %87 : vector<8xf32> to vector<8x1xf32>
    %89 = vector.broadcast %88 : vector<8x1xf32> to vector<8x8xf32>
    %90 = arith.subf %86, %89 : vector<8x8xf32>
    %91 = math.exp %90 : vector<8x8xf32>
    %cst_27 = arith.constant dense<0.000000e+00> : vector<8xf32>
    %92 = vector.multi_reduction <add>, %91, %cst_27 [1] : vector<8x8xf32> to vector<8xf32>
    %93 = vector.shape_cast %92 : vector<8xf32> to vector<8x1xf32>
    %94 = arith.truncf %91 : vector<8x8xf32> to vector<8x8xbf16>
    %95 = vector.extract_strided_slice %9 {offsets = [0, 24], sizes = [8, 8], strides = [1, 1]} : vector<8x32xbf16> to vector<8x8xbf16>
    %cst_28 = arith.constant dense<0.000000e+00> : vector<8x8xf32>
    %96 = tpu.matmul %94, %95, %cst_28 {dimension_numbers = #tpu.dot_dimension_numbers<[1], [0], [0], [1], [0, 0, 1, 1], [], []>} : vector<8x8xbf16>, vector<8x8xbf16>, vector<8x8xf32> -> vector<8x8xf32>
    %97 = tpu.concatenate %36, %56, %76, %96 in 1 : vector<8x8xf32>, vector<8x8xf32>, vector<8x8xf32>, vector<8x8xf32> -> vector<8x32xf32>
    %98 = tpu.concatenate %33, %53, %73, %93 in 1 : vector<8x1xf32>, vector<8x1xf32>, vector<8x1xf32>, vector<8x1xf32> -> vector<8x4xf32>
    %99 = tpu.reciprocal %98 {approx = true} : vector<8x4xf32> -> vector<8x4xf32>
    %100 = vector.extract_strided_slice %99 {offsets = [0, 0], sizes = [8, 1], strides = [1, 1]} : vector<8x4xf32> to vector<8x1xf32>
    %101 = vector.shape_cast %100 : vector<8x1xf32> to vector<8x1xf32>
    %102 = vector.broadcast %101 : vector<8x1xf32> to vector<8x8xf32>
    %103 = vector.extract_strided_slice %99 {offsets = [0, 1], sizes = [8, 1], strides = [1, 1]} : vector<8x4xf32> to vector<8x1xf32>
    %104 = vector.shape_cast %103 : vector<8x1xf32> to vector<8x1xf32>
    %105 = vector.broadcast %104 : vector<8x1xf32> to vector<8x8xf32>
    %106 = vector.extract_strided_slice %99 {offsets = [0, 2], sizes = [8, 1], strides = [1, 1]} : vector<8x4xf32> to vector<8x1xf32>
    %107 = vector.shape_cast %106 : vector<8x1xf32> to vector<8x1xf32>
    %108 = vector.broadcast %107 : vector<8x1xf32> to vector<8x8xf32>
    %109 = vector.extract_strided_slice %99 {offsets = [0, 3], sizes = [8, 1], strides = [1, 1]} : vector<8x4xf32> to vector<8x1xf32>
    %110 = vector.shape_cast %109 : vector<8x1xf32> to vector<8x1xf32>
    %111 = vector.broadcast %110 : vector<8x1xf32> to vector<8x8xf32>
    %112 = tpu.concatenate %102, %105, %108, %111 in 1 : vector<8x8xf32>, vector<8x8xf32>, vector<8x8xf32>, vector<8x8xf32> -> vector<8x32xf32>
    %113 = arith.mulf %97, %112 : vector<8x32xf32>
    %114 = vector.extract_strided_slice %7 {offsets = [0, 0], sizes = [8, 32], strides = [1, 1]} : vector<8x40xf32> to vector<8x32xf32>
    %115 = arith.addf %113, %114 : vector<8x32xf32>
    %c0_29 = arith.constant 0 : index
    %c0_30 = arith.constant 0 : index
    %116 = vector.load %arg6[%c0_29, %c0_30] : memref<1x32xf32, #tpu.memory_space<vmem>>, vector<1x32xf32>
    %117 = vector.broadcast %116 : vector<1x32xf32> to vector<8x32xf32>
    %118 = arith.addf %115, %117 : vector<8x32xf32>
    %c0_31 = arith.constant 0 : index
    %c0_32 = arith.constant 0 : index
    %c0_33 = arith.constant 0 : index
    %119 = vector.load %arg7[%c0_31, %c0_32, %c0_33] : memref<1x8x32xf32, #tpu.memory_space<vmem>>, vector<1x8x32xf32>
    %120 = vector.shape_cast %119 : vector<1x8x32xf32> to vector<8x32xf32>
    %121 = vector.shape_cast %118 : vector<8x32xf32> to vector<1x8x32xf32>
    tpu.vector_store %arg7[%c0_31, %c0_32, %c0_33], %121 {strides = array<i32>} : memref<1x8x32xf32, #tpu.memory_space<vmem>>, vector<1x8x32xf32>,
    return
  }
  func.func @transform_0(%arg0: i32, %arg1: i32) -> (i32, i32, i32) {
    %c0_i32 = arith.constant 0 : i32
    %c0_i32_0 = arith.constant 0 : i32
    %c0_i32_1 = arith.constant 0 : i32
    return %arg0, %c0_i32, %c0_i32_0 : i32, i32, i32
  }
  func.func @transform_1(%arg0: i32, %arg1: i32) -> (i32, i32, i32) {
    %c0_i32 = arith.constant 0 : i32
    %c0_i32_0 = arith.constant 0 : i32
    return %arg0, %arg1, %c0_i32 : i32, i32, i32
  }
  func.func @transform_2(%arg0: i32, %arg1: i32) -> (i32, i32) {
    %c0_i32 = arith.constant 0 : i32
    %c0_i32_0 = arith.constant 0 : i32
    %c0_i32_1 = arith.constant 0 : i32
    return %c0_i32, %c0_i32_0 : i32, i32
  }
  func.func @transform_3(%arg0: i32, %arg1: i32) -> (i32, i32) {
    %c0_i32 = arith.constant 0 : i32
    %c0_i32_0 = arith.constant 0 : i32
    %c0_i32_1 = arith.constant 0 : i32
    return %c0_i32, %c0_i32_0 : i32, i32
  }
  func.func @transform_4(%arg0: i32, %arg1: i32) -> (i32, i32) {
    %c0_i32 = arith.constant 0 : i32
    %c0_i32_0 = arith.constant 0 : i32
    %c0_i32_1 = arith.constant 0 : i32
    return %c0_i32, %c0_i32_0 : i32, i32
  }
  func.func @transform_5(%arg0: i32, %arg1: i32) -> (i32, i32, i32) {
    %c0_i32 = arith.constant 0 : i32
    %c0_i32_0 = arith.constant 0 : i32
    return %arg0, %arg1, %c0_i32 : i32, i32, i32
  }
}

module attributes {stable_mosaic.version = 11 : i64} {
  func.func @_gat_kernel(%arg0: i32, %arg1: i32, %arg2: memref<1x8x32xf32, #tpu.memory_space<vmem>>, %arg3: memref<1x8x8xi8, #tpu.memory_space<vmem>>, %arg4: memref<32x40xbf16, #tpu.memory_space<vmem>>, %arg5: memref<1x40xf32, #tpu.memory_space<vmem>>, %arg6: memref<1x32xf32, #tpu.memory_space<vmem>>, %arg7: memref<1x8x32xf32, #tpu.memory_space<vmem>>) attributes {dimension_semantics = [#tpu.dimension_semantics<parallel>, #tpu.dimension_semantics<parallel>], iteration_bounds = array<i64: 2, 1>, scalar_prefetch = 0 : i64, scratch_operands = 0 : i64, tpu.core_type = #tpu.core_type<tc>, window_params = [{transform_indices = @transform_0, window_bounds = array<i64: 1, 8, 32>}, {transform_indices = @transform_1, window_bounds = array<i64: 1, 8, 8>}, {pipeline_mode = #tpu.pipeline_mode<synchronous>, transform_indices = @transform_2, window_bounds = array<i64: 32, 40>}, {pipeline_mode = #tpu.pipeline_mode<synchronous>, transform_indices = @transform_3, window_bounds = array<i64: 1, 40>}, {pipeline_mode = #tpu.pipeline_mode<synchronous>, transform_indices = @transform_4, window_bounds = array<i64: 1, 32>}, {transform_indices = @transform_5, window_bounds = array<i64: 1, 8, 32>}]} {
    %c0 = arith.constant 0 : index
    %c0_0 = arith.constant 0 : index
    %c0_1 = arith.constant 0 : index
    %0 = vector.load %arg2[%c0, %c0_0, %c0_1] : memref<1x8x32xf32, #tpu.memory_space<vmem>>, vector<1x8x32xf32>
    %1 = vector.shape_cast %0 : vector<1x8x32xf32> to vector<8x32xf32>
    %2 = arith.truncf %1 : vector<8x32xf32> to vector<8x32xbf16>
    %c0_2 = arith.constant 0 : index
    %c0_3 = arith.constant 0 : index
    %3 = vector.load %arg4[%c0_2, %c0_3] : memref<32x40xbf16, #tpu.memory_space<vmem>>, vector<32x40xbf16>
    %cst = arith.constant dense<0.000000e+00> : vector<8x40xf32>
    %4 = tpu.matmul %2, %3, %cst {dimension_numbers = #tpu.dot_dimension_numbers<[1], [0], [0], [1], [0, 0, 1, 1], [], []>} : vector<8x32xbf16>, vector<32x40xbf16>, vector<8x40xf32> -> vector<8x40xf32>
    %c0_4 = arith.constant 0 : index
    %c0_5 = arith.constant 0 : index
    %5 = vector.load %arg5[%c0_4, %c0_5] : memref<1x40xf32, #tpu.memory_space<vmem>>, vector<1x40xf32>
    %6 = vector.broadcast %5 : vector<1x40xf32> to vector<8x40xf32>
    %7 = arith.addf %4, %6 : vector<8x40xf32>
    %8 = vector.extract_strided_slice %7 {offsets = [0, 0], sizes = [8, 32], strides = [1, 1]} : vector<8x40xf32> to vector<8x32xf32>
    %9 = arith.truncf %8 : vector<8x32xf32> to vector<8x32xbf16>
    %10 = vector.extract_strided_slice %7 {offsets = [0, 32], sizes = [8, 4], strides = [1, 1]} : vector<8x40xf32> to vector<8x4xf32>
    %11 = tpu.transpose %10, [1, 0] : vector<8x4xf32> -> vector<4x8xf32>
    %12 = vector.extract_strided_slice %7 {offsets = [0, 36], sizes = [8, 4], strides = [1, 1]} : vector<8x40xf32> to vector<8x4xf32>
    %c0_6 = arith.constant 0 : index
    %c0_7 = arith.constant 0 : index
    %c0_8 = arith.constant 0 : index
    %13 = vector.load %arg3[%c0_6, %c0_7, %c0_8] : memref<1x8x8xi8, #tpu.memory_space<vmem>>, vector<1x8x8xi8>
    %14 = vector.shape_cast %13 : vector<1x8x8xi8> to vector<8x8xi8>
    %c0_i8 = arith.constant 0 : i8
    %15 = vector.broadcast %c0_i8 : i8 to vector<8x8xi8>
    %16 = arith.cmpi ne, %14, %15 : vector<8x8xi8>
    %17 = vector.extract_strided_slice %12 {offsets = [0, 0], sizes = [8, 1], strides = [1, 1]} : vector<8x4xf32> to vector<8x1xf32>
    %18 = vector.extract_strided_slice %11 {offsets = [0, 0], sizes = [1, 8], strides = [1, 1]} : vector<4x8xf32> to vector<1x8xf32>
    %19 = vector.broadcast %17 : vector<8x1xf32> to vector<8x8xf32>
    %20 = vector.broadcast %18 : vector<1x8xf32> to vector<8x8xf32>
    %21 = arith.addf %19, %20 : vector<8x8xf32>
    %cst_9 = arith.constant 0.000000e+00 : f32
    %22 = vector.broadcast %cst_9 : f32 to vector<8x8xf32>
    %23 = arith.select %16, %21, %22 : vector<8x8xi1>, vector<8x8xf32>
    %cst_10 = arith.constant 2.000000e-01 : f32
    %24 = vector.broadcast %cst_10 : f32 to vector<8x8xf32>
    %25 = arith.mulf %24, %23 : vector<8x8xf32>
    %26 = arith.maximumf %23, %25 : vector<8x8xf32>
    %cst_11 = arith.constant dense<0xFF800000> : vector<8xf32>
    %27 = vector.multi_reduction <maximumf>, %26, %cst_11 [1] : vector<8x8xf32> to vector<8xf32>
    %28 = vector.shape_cast %27 : vector<8xf32> to vector<8x1xf32>
    %29 = vector.broadcast %28 : vector<8x1xf32> to vector<8x8xf32>
    %30 = arith.subf %26, %29 : vector<8x8xf32>
    %31 = math.exp %30 : vector<8x8xf32>
    %cst_12 = arith.constant dense<0.000000e+00> : vector<8xf32>
    %32 = vector.multi_reduction <add>, %31, %cst_12 [1] : vector<8x8xf32> to vector<8xf32>
    %33 = vector.shape_cast %32 : vector<8xf32> to vector<8x1xf32>
    %34 = arith.truncf %31 : vector<8x8xf32> to vector<8x8xbf16>
    %35 = vector.extract_strided_slice %9 {offsets = [0, 0], sizes = [8, 8], strides = [1, 1]} : vector<8x32xbf16> to vector<8x8xbf16>
    %cst_13 = arith.constant dense<0.000000e+00> : vector<8x8xf32>
    %36 = tpu.matmul %34, %35, %cst_13 {dimension_numbers = #tpu.dot_dimension_numbers<[1], [0], [0], [1], [0, 0, 1, 1], [], []>} : vector<8x8xbf16>, vector<8x8xbf16>, vector<8x8xf32> -> vector<8x8xf32>
    %37 = vector.extract_strided_slice %12 {offsets = [0, 1], sizes = [8, 1], strides = [1, 1]} : vector<8x4xf32> to vector<8x1xf32>
    %38 = vector.extract_strided_slice %11 {offsets = [1, 0], sizes = [1, 8], strides = [1, 1]} : vector<4x8xf32> to vector<1x8xf32>
    %39 = vector.broadcast %37 : vector<8x1xf32> to vector<8x8xf32>
    %40 = vector.broadcast %38 : vector<1x8xf32> to vector<8x8xf32>
    %41 = arith.addf %39, %40 : vector<8x8xf32>
    %cst_14 = arith.constant 0.000000e+00 : f32
    %42 = vector.broadcast %cst_14 : f32 to vector<8x8xf32>
    %43 = arith.select %16, %41, %42 : vector<8x8xi1>, vector<8x8xf32>
    %cst_15 = arith.constant 2.000000e-01 : f32
    %44 = vector.broadcast %cst_15 : f32 to vector<8x8xf32>
    %45 = arith.mulf %44, %43 : vector<8x8xf32>
    %46 = arith.maximumf %43, %45 : vector<8x8xf32>
    %cst_16 = arith.constant dense<0xFF800000> : vector<8xf32>
    %47 = vector.multi_reduction <maximumf>, %46, %cst_16 [1] : vector<8x8xf32> to vector<8xf32>
    %48 = vector.shape_cast %47 : vector<8xf32> to vector<8x1xf32>
    %49 = vector.broadcast %48 : vector<8x1xf32> to vector<8x8xf32>
    %50 = arith.subf %46, %49 : vector<8x8xf32>
    %51 = math.exp %50 : vector<8x8xf32>
    %cst_17 = arith.constant dense<0.000000e+00> : vector<8xf32>
    %52 = vector.multi_reduction <add>, %51, %cst_17 [1] : vector<8x8xf32> to vector<8xf32>
    %53 = vector.shape_cast %52 : vector<8xf32> to vector<8x1xf32>
    %54 = arith.truncf %51 : vector<8x8xf32> to vector<8x8xbf16>
    %55 = vector.extract_strided_slice %9 {offsets = [0, 8], sizes = [8, 8], strides = [1, 1]} : vector<8x32xbf16> to vector<8x8xbf16>
    %cst_18 = arith.constant dense<0.000000e+00> : vector<8x8xf32>
    %56 = tpu.matmul %54, %55, %cst_18 {dimension_numbers = #tpu.dot_dimension_numbers<[1], [0], [0], [1], [0, 0, 1, 1], [], []>} : vector<8x8xbf16>, vector<8x8xbf16>, vector<8x8xf32> -> vector<8x8xf32>
    %57 = vector.extract_strided_slice %12 {offsets = [0, 2], sizes = [8, 1], strides = [1, 1]} : vector<8x4xf32> to vector<8x1xf32>
    %58 = vector.extract_strided_slice %11 {offsets = [2, 0], sizes = [1, 8], strides = [1, 1]} : vector<4x8xf32> to vector<1x8xf32>
    %59 = vector.broadcast %57 : vector<8x1xf32> to vector<8x8xf32>
    %60 = vector.broadcast %58 : vector<1x8xf32> to vector<8x8xf32>
    %61 = arith.addf %59, %60 : vector<8x8xf32>
    %cst_19 = arith.constant 0.000000e+00 : f32
    %62 = vector.broadcast %cst_19 : f32 to vector<8x8xf32>
    %63 = arith.select %16, %61, %62 : vector<8x8xi1>, vector<8x8xf32>
    %cst_20 = arith.constant 2.000000e-01 : f32
    %64 = vector.broadcast %cst_20 : f32 to vector<8x8xf32>
    %65 = arith.mulf %64, %63 : vector<8x8xf32>
    %66 = arith.maximumf %63, %65 : vector<8x8xf32>
    %cst_21 = arith.constant dense<0xFF800000> : vector<8xf32>
    %67 = vector.multi_reduction <maximumf>, %66, %cst_21 [1] : vector<8x8xf32> to vector<8xf32>
    %68 = vector.shape_cast %67 : vector<8xf32> to vector<8x1xf32>
    %69 = vector.broadcast %68 : vector<8x1xf32> to vector<8x8xf32>
    %70 = arith.subf %66, %69 : vector<8x8xf32>
    %71 = math.exp %70 : vector<8x8xf32>
    %cst_22 = arith.constant dense<0.000000e+00> : vector<8xf32>
    %72 = vector.multi_reduction <add>, %71, %cst_22 [1] : vector<8x8xf32> to vector<8xf32>
    %73 = vector.shape_cast %72 : vector<8xf32> to vector<8x1xf32>
    %74 = arith.truncf %71 : vector<8x8xf32> to vector<8x8xbf16>
    %75 = vector.extract_strided_slice %9 {offsets = [0, 16], sizes = [8, 8], strides = [1, 1]} : vector<8x32xbf16> to vector<8x8xbf16>
    %cst_23 = arith.constant dense<0.000000e+00> : vector<8x8xf32>
    %76 = tpu.matmul %74, %75, %cst_23 {dimension_numbers = #tpu.dot_dimension_numbers<[1], [0], [0], [1], [0, 0, 1, 1], [], []>} : vector<8x8xbf16>, vector<8x8xbf16>, vector<8x8xf32> -> vector<8x8xf32>
    %77 = vector.extract_strided_slice %12 {offsets = [0, 3], sizes = [8, 1], strides = [1, 1]} : vector<8x4xf32> to vector<8x1xf32>
    %78 = vector.extract_strided_slice %11 {offsets = [3, 0], sizes = [1, 8], strides = [1, 1]} : vector<4x8xf32> to vector<1x8xf32>
    %79 = vector.broadcast %77 : vector<8x1xf32> to vector<8x8xf32>
    %80 = vector.broadcast %78 : vector<1x8xf32> to vector<8x8xf32>
    %81 = arith.addf %79, %80 : vector<8x8xf32>
    %cst_24 = arith.constant 0.000000e+00 : f32
    %82 = vector.broadcast %cst_24 : f32 to vector<8x8xf32>
    %83 = arith.select %16, %81, %82 : vector<8x8xi1>, vector<8x8xf32>
    %cst_25 = arith.constant 2.000000e-01 : f32
    %84 = vector.broadcast %cst_25 : f32 to vector<8x8xf32>
    %85 = arith.mulf %84, %83 : vector<8x8xf32>
    %86 = arith.maximumf %83, %85 : vector<8x8xf32>
    %cst_26 = arith.constant dense<0xFF800000> : vector<8xf32>
    %87 = vector.multi_reduction <maximumf>, %86, %cst_26 [1] : vector<8x8xf32> to vector<8xf32>
    %88 = vector.shape_cast %87 : vector<8xf32> to vector<8x1xf32>
    %89 = vector.broadcast %88 : vector<8x1xf32> to vector<8x8xf32>
    %90 = arith.subf %86, %89 : vector<8x8xf32>
    %91 = math.exp %90 : vector<8x8xf32>
    %cst_27 = arith.constant dense<0.000000e+00> : vector<8xf32>
    %92 = vector.multi_reduction <add>, %91, %cst_27 [1] : vector<8x8xf32> to vector<8xf32>
    %93 = vector.shape_cast %92 : vector<8xf32> to vector<8x1xf32>
    %94 = arith.truncf %91 : vector<8x8xf32> to vector<8x8xbf16>
    %95 = vector.extract_strided_slice %9 {offsets = [0, 24], sizes = [8, 8], strides = [1, 1]} : vector<8x32xbf16> to vector<8x8xbf16>
    %cst_28 = arith.constant dense<0.000000e+00> : vector<8x8xf32>
    %96 = tpu.matmul %94, %95, %cst_28 {dimension_numbers = #tpu.dot_dimension_numbers<[1], [0], [0], [1], [0, 0, 1, 1], [], []>} : vector<8x8xbf16>, vector<8x8xbf16>, vector<8x8xf32> -> vector<8x8xf32>
    %97 = tpu.concatenate %36, %56, %76, %96 in 1 : vector<8x8xf32>, vector<8x8xf32>, vector<8x8xf32>, vector<8x8xf32> -> vector<8x32xf32>
    %98 = tpu.concatenate %33, %53, %73, %93 in 1 : vector<8x1xf32>, vector<8x1xf32>, vector<8x1xf32>, vector<8x1xf32> -> vector<8x4xf32>
    %99 = tpu.reciprocal %98 {approx = true} : vector<8x4xf32> -> vector<8x4xf32>
    %100 = vector.extract_strided_slice %99 {offsets = [0, 0], sizes = [8, 1], strides = [1, 1]} : vector<8x4xf32> to vector<8x1xf32>
    %101 = vector.shape_cast %100 : vector<8x1xf32> to vector<8x1xf32>
    %102 = vector.broadcast %101 : vector<8x1xf32> to vector<8x8xf32>
    %103 = vector.extract_strided_slice %99 {offsets = [0, 1], sizes = [8, 1], strides = [1, 1]} : vector<8x4xf32> to vector<8x1xf32>
    %104 = vector.shape_cast %103 : vector<8x1xf32> to vector<8x1xf32>
    %105 = vector.broadcast %104 : vector<8x1xf32> to vector<8x8xf32>
    %106 = vector.extract_strided_slice %99 {offsets = [0, 2], sizes = [8, 1], strides = [1, 1]} : vector<8x4xf32> to vector<8x1xf32>
    %107 = vector.shape_cast %106 : vector<8x1xf32> to vector<8x1xf32>
    %108 = vector.broadcast %107 : vector<8x1xf32> to vector<8x8xf32>
    %109 = vector.extract_strided_slice %99 {offsets = [0, 3], sizes = [8, 1], strides = [1, 1]} : vector<8x4xf32> to vector<8x1xf32>
    %110 = vector.shape_cast %109 : vector<8x1xf32> to vector<8x1xf32>
    %111 = vector.broadcast %110 : vector<8x1xf32> to vector<8x8xf32>
    %112 = tpu.concatenate %102, %105, %108, %111 in 1 : vector<8x8xf32>, vector<8x8xf32>, vector<8x8xf32>, vector<8x8xf32> -> vector<8x32xf32>
    %113 = arith.mulf %97, %112 : vector<8x32xf32>
    %114 = vector.extract_strided_slice %7 {offsets = [0, 0], sizes = [8, 32], strides = [1, 1]} : vector<8x40xf32> to vector<8x32xf32>
    %115 = arith.addf %113, %114 : vector<8x32xf32>
    %c0_29 = arith.constant 0 : index
    %c0_30 = arith.constant 0 : index
    %116 = vector.load %arg6[%c0_29, %c0_30] : memref<1x32xf32, #tpu.memory_space<vmem>>, vector<1x32xf32>
    %117 = vector.broadcast %116 : vector<1x32xf32> to vector<8x32xf32>
    %118 = arith.addf %115, %117 : vector<8x32xf32>
    %c0_31 = arith.constant 0 : index
    %c0_32 = arith.constant 0 : index
    %c0_33 = arith.constant 0 : index
    %119 = vector.load %arg7[%c0_31, %c0_32, %c0_33] : memref<1x8x32xf32, #tpu.memory_space<vmem>>, vector<1x8x32xf32>
    %120 = vector.shape_cast %119 : vector<1x8x32xf32> to vector<8x32xf32>
    %121 = vector.shape_cast %118 : vector<8x32xf32> to vector<1x8x32xf32>
    tpu.vector_store %arg7[%c0_31, %c0_32, %c0_33], %121 {strides = array<i32>} : memref<1x8x32xf32, #tpu.memory_space<vmem>>, vector<1x8x32xf32>,
    return
  }
  func.func @transform_0(%arg0: i32, %arg1: i32) -> (i32, i32, i32) {
    %c0_i32 = arith.constant 0 : i32
    %c0_i32_0 = arith.constant 0 : i32
    %c0_i32_1 = arith.constant 0 : i32
    return %arg0, %c0_i32, %c0_i32_0 : i32, i32, i32
  }
  func.func @transform_1(%arg0: i32, %arg1: i32) -> (i32, i32, i32) {
    %c0_i32 = arith.constant 0 : i32
    %c0_i32_0 = arith.constant 0 : i32
    return %arg0, %arg1, %c0_i32 : i32, i32, i32
  }
  func.func @transform_2(%arg0: i32, %arg1: i32) -> (i32, i32) {
    %c0_i32 = arith.constant 0 : i32
    %c0_i32_0 = arith.constant 0 : i32
    %c0_i32_1 = arith.constant 0 : i32
    return %c0_i32, %c0_i32_0 : i32, i32
  }
  func.func @transform_3(%arg0: i32, %arg1: i32) -> (i32, i32) {
    %c0_i32 = arith.constant 0 : i32
    %c0_i32_0 = arith.constant 0 : i32
    %c0_i32_1 = arith.constant 0 : i32
    return %c0_i32, %c0_i32_0 : i32, i32
  }
  func.func @transform_4(%arg0: i32, %arg1: i32) -> (i32, i32) {
    %c0_i32 = arith.constant 0 : i32
    %c0_i32_0 = arith.constant 0 : i32
    %c0_i32_1 = arith.constant 0 : i32
    return %c0_i32, %c0_i32_0 : i32, i32
  }
  func.func @transform_5(%arg0: i32, %arg1: i32) -> (i32, i32, i32) {
    %c0_i32 = arith.constant 0 : i32
    %c0_i32_0 = arith.constant 0 : i32
    return %arg0, %arg1, %c0_i32 : i32, i32, i32
  }
}

</mosaic_0001>

<llo_original>
// kernel: tpu_custom_call.1
$region0: #{tpu_custom_call.1}
  #allocation0 [shape = 'u32[]', space=smem, size = 0x4, offset = 0x4, fixed_abs, tag = 'smem constant byte address 0x4 - core index']
  #allocation1 [shape = 'u32[72,128]{1,0:T(1,128)}', space=vmem, size = 0x9000, scoped, tag = 'internal scratch']
  %s0 = inlined_call_operand.hbm [shape: f32[2,8,32], index: 0, kind: input, shape index: {}]
  %s1 = inlined_call_operand.hbm [shape: s8[2,8,8], index: 1, kind: input, shape index: {}]
  %s2 = inlined_call_operand.hbm [shape: bf16[32,40], index: 2, kind: input, shape index: {}]
  %s3 = inlined_call_operand.vmem [shape: f32[1,40], index: 3, kind: input, shape index: {}]
  %s4 = inlined_call_operand.vmem [shape: f32[1,32], index: 4, kind: input, shape index: {}]
  %s5 = inlined_call_operand.hbm [shape: f32[2,8,32], index: 5, kind: output, shape index: {}]
  %s6 = sld [smem:[#allocation0]]
  $region65: #{tpu_custom_call.1} parent=0
    _
  %s8 = ssub.s32 1, %s6
  %s9 = scalar_select 0, %s8, %s6
  $region1: #{tpu_custom_call.1} parent=0
    #allocation2 [shape = 'u8[8192]{0}', space=vmem, size = 0x2000, scoped, tag = 'input window, operand 0']
    #allocation3 [shape = 's32[2]{0}', space=sflag, size = 0x8, scoped, tag = 'scoped memory for tpu_custom_call.1']
    #allocation4 [shape = 's32[2]{0}', space=sflag, size = 0x8, scoped, tag = 'scoped memory for tpu_custom_call.1']
    #allocation5 [shape = 'u8[2048]{0}', space=vmem, size = 0x800, scoped, tag = 'input window, operand 1']
    #allocation6 [shape = 's32[2]{0}', space=sflag, size = 0x8, scoped, tag = 'scoped memory for tpu_custom_call.1']
    #allocation7 [shape = 'u8[8192]{0}', space=vmem, size = 0x2000, scoped, tag = 'input window, operand 2, single buffered']
    #allocation8 [shape = 'u8[8192]{0}', space=vmem, size = 0x2000, scoped, tag = 'output window, operand 0']
    %10 = vsyncpa [#allocation3], 0
    %s11 = scalar_lea.sflag [#allocation3], 1
    %12 = vsyncpa %s11, 0
    %13 = vsyncpa [#allocation6], 0
    %s14 = scalar_lea.sflag [#allocation6], 1
    %15 = vsyncpa %s14, 0
    %16 = vsyncpa [#allocation4], 0
    %s17 = scalar_lea.sflag [#allocation4], 1
    %18 = vsyncpa %s17, 0
    loop: start=0, step=1, limit=4
    $region2: #{tpu_custom_call.1} parent=1 // loop_pre_header
      _
    $region3: #{tpu_custom_call.1} parent=1 // loop_header
      %s20 = sphi 0, %s24
      %p21 = scmp.ge.s32.totalorder %s20, 4
      %s27 = sphi 0, %s39
      %s28 = sphi 0, %s35
      %s29 = sphi 0, %s27
      %s30 = sphi 0, %s28
      %s31 = sphi 0, %s29
      %s32 = sphi 0, %s30
      %s42 = sphi 0, %s44
      %s45 = sphi 0, %s42
      %s46 = sphi 0, %s45
      %s62 = sphi 0, %s46
      %s70 = sphi 0, %s72
      %s73 = sphi 0, %s70
      %s74 = sphi 0, %s73
      %s90 = sphi 0, %s74
      %s94 = sphi 0, %s94
      %s96 = sphi 0, %s94
      %s97 = sphi 0, %s96
      %s111 = sphi 0, %s97
      %s115 = sphi 0, %s115
      %s117 = sphi 0, %s115
      %s118 = sphi 0, %s117
      %s132 = sphi 0, %s118
      %s136 = sphi 0, %s136
      %s138 = sphi 0, %s136
      %s139 = sphi 0, %s138
      %s153 = sphi 0, %s139
      %s161 = sphi 0, %s163
      %s164 = sphi 0, %s161
      %s165 = sphi 0, %s164
      %s181 = sphi 0, %s165
    $region4: #{tpu_custom_call.1} parent=1 // loop_header_branch
      %23 = sbr.rel (%p21) target = $region8
    $region5: #{tpu_custom_call.1} parent=1 // loop_body
      %s25 = ssub.s32 %s20, 1
      %s26 = ssub.s32 %s20, 2
      %s33 = sadd.s32 1, %s28
      %p34 = scmp.ge.s32.totalorder %s33, 1
      %s35 = scalar_select %p34, 0, %s33
      %s36 = sadd.s32 1, %s27
      %s37 = scalar_select %p34, %s36, %s27
      %p38 = scmp.ge.s32.totalorder %s37, 2
      %s39 = scalar_select %p38, 0, %s37
      %s40 = ssub.s32 %s27, %s39
      %p41 = scmp.eq.s32.totalorder %s40, 0
      %s43 = sadd.s32 %s42, 1
      %s44 = scalar_select %p41, %s42, %s43
      %p47 = pneg %p41
      %p48 = scmp.eq.s32.totalorder %s20, 1
      %p49 = por %p47, %p48
      %p50 = scmp.ne.s32.totalorder %s42, %s45
      %p51 = scmp.eq.s32.totalorder %s20, 0
      %p52 = por %p50, %p51
      %p53 = scmp.ne.s32.totalorder %s42, %s45
      %p54 = scmp.eq.s32.totalorder %s25, 1
      %p55 = por %p53, %p54
      %p56 = scmp.ne.s32.totalorder %s45, %s46
      %p57 = scmp.eq.s32.totalorder %s25, 0
      %p58 = por %p56, %p57
      %p59 = scmp.ne.s32.totalorder %s45, %s46
      %p60 = scmp.eq.s32.totalorder %s26, 1
      %p61 = por %p59, %p60
      %p63 = scmp.ne.s32.totalorder %s46, %s62
      %p64 = scmp.eq.s32.totalorder %s26, 0
      %p65 = por %p63, %p64
      %s66 = ssub.s32 %s27, %s39
      %s67 = ssub.s32 %s28, %s35
      %s68 = sor.u32 %s66, %s67
      %p69 = scmp.eq.s32.totalorder %s68, 0
      %s71 = sadd.s32 %s70, 1
      %s72 = scalar_select %p69, %s70, %s71
      %p75 = pneg %p69
      %p76 = scmp.eq.s32.totalorder %s20, 1
      %p77 = por %p75, %p76
      %p78 = scmp.ne.s32.totalorder %s70, %s73
      %p79 = scmp.eq.s32.totalorder %s20, 0
      %p80 = por %p78, %p79
      %p81 = scmp.ne.s32.totalorder %s70, %s73
      %p82 = scmp.eq.s32.totalorder %s25, 1
      %p83 = por %p81, %p82
      %p84 = scmp.ne.s32.totalorder %s73, %s74
      %p85 = scmp.eq.s32.totalorder %s25, 0
      %p86 = por %p84, %p85
      %p87 = scmp.ne.s32.totalorder %s73, %s74
      %p88 = scmp.eq.s32.totalorder %s26, 1
      %p89 = por %p87, %p88
      %p91 = scmp.ne.s32.totalorder %s74, %s90
      %p92 = scmp.eq.s32.totalorder %s26, 0
      %p93 = por %p91, %p92
      %s95 = sadd.s32 %s94, 1
      %p98 = scmp.eq.s32.totalorder %s20, 1
      %p99 = scmp.ne.s32.totalorder %s94, %s96
      %p100 = scmp.eq.s32.totalorder %s20, 0
      %p101 = por %p99, %p100
      %p102 = scmp.ne.s32.totalorder %s94, %s96
      %p103 = scmp.eq.s32.totalorder %s25, 1
      %p104 = por %p102, %p103
      %p105 = scmp.ne.s32.totalorder %s96, %s97
      %p106 = scmp.eq.s32.totalorder %s25, 0
      %p107 = por %p105, %p106
      %p108 = scmp.ne.s32.totalorder %s96, %s97
      %p109 = scmp.eq.s32.totalorder %s26, 1
      %p110 = por %p108, %p109
      %p112 = scmp.ne.s32.totalorder %s97, %s111
      %p113 = scmp.eq.s32.totalorder %s26, 0
      %p114 = por %p112, %p113
      %s116 = sadd.s32 %s115, 1
      %p119 = scmp.eq.s32.totalorder %s20, 1
      %p120 = scmp.ne.s32.totalorder %s115, %s117
      %p121 = scmp.eq.s32.totalorder %s20, 0
      %p122 = por %p120, %p121
      %p123 = scmp.ne.s32.totalorder %s115, %s117
      %p124 = scmp.eq.s32.totalorder %s25, 1
      %p125 = por %p123, %p124
      %p126 = scmp.ne.s32.totalorder %s117, %s118
      %p127 = scmp.eq.s32.totalorder %s25, 0
      %p128 = por %p126, %p127
      %p129 = scmp.ne.s32.totalorder %s117, %s118
      %p130 = scmp.eq.s32.totalorder %s26, 1
      %p131 = por %p129, %p130
      %p133 = scmp.ne.s32.totalorder %s118, %s132
      %p134 = scmp.eq.s32.totalorder %s26, 0
      %p135 = por %p133, %p134
      %s137 = sadd.s32 %s136, 1
      %p140 = scmp.eq.s32.totalorder %s20, 1
      %p141 = scmp.ne.s32.totalorder %s136, %s138
      %p142 = scmp.eq.s32.totalorder %s20, 0
      %p143 = por %p141, %p142
      %p144 = scmp.ne.s32.totalorder %s136, %s138
      %p145 = scmp.eq.s32.totalorder %s25, 1
      %p146 = por %p144, %p145
      %p147 = scmp.ne.s32.totalorder %s138, %s139
      %p148 = scmp.eq.s32.totalorder %s25, 0
      %p149 = por %p147, %p148
      %p150 = scmp.ne.s32.totalorder %s138, %s139
      %p151 = scmp.eq.s32.totalorder %s26, 1
      %p152 = por %p150, %p151
      %p154 = scmp.ne.s32.totalorder %s139, %s153
      %p155 = scmp.eq.s32.totalorder %s26, 0
      %p156 = por %p154, %p155
      %s157 = ssub.s32 %s27, %s39
      %s158 = ssub.s32 %s28, %s35
      %s159 = sor.u32 %s157, %s158
      %p160 = scmp.eq.s32.totalorder %s159, 0
      %s162 = sadd.s32 %s161, 1
      %s163 = scalar_select %p160, %s161, %s162
      %p166 = pneg %p160
      %p167 = scmp.eq.s32.totalorder %s20, 1
      %p168 = por %p166, %p167
      %p169 = scmp.ne.s32.totalorder %s161, %s164
      %p170 = scmp.eq.s32.totalorder %s20, 0
      %p171 = por %p169, %p170
      %p172 = scmp.ne.s32.totalorder %s161, %s164
      %p173 = scmp.eq.s32.totalorder %s25, 1
      %p174 = por %p172, %p173
      %p175 = scmp.ne.s32.totalorder %s164, %s165
      %p176 = scmp.eq.s32.totalorder %s25, 0
      %p177 = por %p175, %p176
      %p178 = scmp.ne.s32.totalorder %s164, %s165
      %p179 = scmp.eq.s32.totalorder %s26, 1
      %p180 = por %p178, %p179
      %p182 = scmp.ne.s32.totalorder %s165, %s181
      %p183 = scmp.eq.s32.totalorder %s26, 0
      %p184 = por %p182, %p183
      %p185 = scmp.le.s32.totalorder 1, %s20
      %p186 = scmp.lt.s32.totalorder %s20, 3
      %p187 = pnand %p185, %p186
      %p188 = pneg %p187
      // Predicated region
      $region9: #{tpu_custom_call.1} parent=5 // pred_check
        _
      $region10: #{tpu_custom_call.1} parent=5 // pred_check_branch
        %190 = sbr.rel (%p187) target = $region12
      $region11: #{tpu_custom_call.1} parent=5 // pred_region
        %s191 = ssub.s32 %s20, 1
        // Predicated region
        $region13: #{tpu_custom_call.1} parent=11 // pred_check
          %p192 = pneg %p107
        $region14: #{tpu_custom_call.1} parent=11 // pred_check_branch
          %194 = sbr.rel (%p192) target = $region16
        $region15: #{tpu_custom_call.1} parent=11 // pred_region
          %196 = vsyncadd [#allocation6], 0
          %s197 = sshll.u32 %s2, 4
          %s198 = int_to_ptr.hbm [resolvable:$true] %s197
          %s199 = sshll.u32 [#allocation7], 4
          %s200 = int_to_ptr.vmem [resolvable:$true] %s199
          %205 = dma.hbm_to_vmem [thread:$0]  %s198, 256, %s200, [#allocation6], 64, 64, 4
        $region16: #{tpu_custom_call.1} parent=11 // pred_fallthru
          _
        // Predicated region
        $region17: #{tpu_custom_call.1} parent=11 // pred_check
          %p206 = pneg %p128
        $region18: #{tpu_custom_call.1} parent=11 // pred_check_branch
          %208 = sbr.rel (%p206) target = $region20
        $region19: #{tpu_custom_call.1} parent=11 // pred_region
          _
        $region20: #{tpu_custom_call.1} parent=11 // pred_fallthru
          _
        // Predicated region
        $region21: #{tpu_custom_call.1} parent=11 // pred_check
          %p209 = pneg %p149
        $region22: #{tpu_custom_call.1} parent=11 // pred_check_branch
          %211 = sbr.rel (%p209) target = $region24
        $region23: #{tpu_custom_call.1} parent=11 // pred_region
          _
        $region24: #{tpu_custom_call.1} parent=11 // pred_fallthru
          _
      $region12: #{tpu_custom_call.1} parent=5 // pred_fallthru
        _
      %p212 = scmp.lt.s32.totalorder %s20, 2
      // Predicated region
      $region25: #{tpu_custom_call.1} parent=5 // pred_check
        %p213 = pneg %p212
      $region26: #{tpu_custom_call.1} parent=5 // pred_check_branch
        %215 = sbr.rel (%p213) target = $region28
      $region27: #{tpu_custom_call.1} parent=5 // pred_region
        // Predicated region
        $region29: #{tpu_custom_call.1} parent=27 // pred_check
          %p216 = pneg %p52
        $region30: #{tpu_custom_call.1} parent=27 // pred_check_branch
          %218 = sbr.rel (%p216) target = $region32
        $region31: #{tpu_custom_call.1} parent=27 // pred_region
          %s219 = sand.u32 %s42, 1
          %s220 = scalar_lea.sflag [#allocation3], %s219
          %s221 = sand.u32 %s42, 1
          %s222 = smul.addr %s221, 8
          %s223 = scalar_lea.vmem [#allocation2], %s222
          %225 = vsyncadd %s220, 0
          %s226 = smul.addr %s27, 8
          %s227 = scalar_lea.hbm %s0, %s226
          %s229 = sshll.u32 %s227, 4
          %s230 = int_to_ptr.hbm [resolvable:$true] %s229
          %s231 = sshll.u32 %s223, 4
          %s232 = int_to_ptr.vmem [resolvable:$true] %s231
          %234 = dma.hbm_to_vmem [thread:$0]  %s230, 128, %s232, %s220
        $region32: #{tpu_custom_call.1} parent=27 // pred_fallthru
          _
        // Predicated region
        $region33: #{tpu_custom_call.1} parent=27 // pred_check
          %p235 = pneg %p80
        $region34: #{tpu_custom_call.1} parent=27 // pred_check_branch
          %237 = sbr.rel (%p235) target = $region36
        $region35: #{tpu_custom_call.1} parent=27 // pred_region
          %s238 = sand.u32 %s20, 1
          %s239 = scalar_lea.sflag [#allocation6], %s238
          %s240 = sand.u32 %s70, 1
          %s241 = smul.addr %s240, 2
          %s242 = scalar_lea.vmem [#allocation5], %s241
          %244 = vsyncadd %s239, 0
          %s245 = sadd.s32 %s28, %s27
          %s246 = smul.addr %s245, 2
          %s247 = scalar_lea.hbm %s1, %s246
          %s249 = sshll.u32 %s247, 4
          %s250 = int_to_ptr.hbm [resolvable:$true] %s249
          %s251 = sshll.u32 %s242, 4
          %s252 = int_to_ptr.vmem [resolvable:$true] %s251
          %254 = dma.hbm_to_vmem [thread:$0]  %s250, 32, %s252, %s239
        $region36: #{tpu_custom_call.1} parent=27 // pred_fallthru
          _
      $region28: #{tpu_custom_call.1} parent=5 // pred_fallthru
        _
      %p255 = scmp.le.s32.totalorder 1, %s20
      %p256 = scmp.lt.s32.totalorder %s20, 3
      %p257 = pnand %p255, %p256
      %p258 = pneg %p257
      // Predicated region
      $region37: #{tpu_custom_call.1} parent=5 // pred_check
        _
      $region38: #{tpu_custom_call.1} parent=5 // pred_check_branch
        %260 = sbr.rel (%p257) target = $region40
      $region39: #{tpu_custom_call.1} parent=5 // pred_region
        %s261 = ssub.s32 %s20, 1
        %s262 = sand.u32 %s45, 1
        %s263 = scalar_lea.sflag [#allocation3], %s262
        %s264 = sand.u32 %s45, 1
        %s265 = smul.addr %s264, 8
        %s266 = scalar_lea.vmem [#allocation2], %s265
        // Predicated region
        $region41: #{tpu_custom_call.1} parent=39 // pred_check
          %p267 = pneg %p58
        $region42: #{tpu_custom_call.1} parent=39 // pred_check_branch
          %269 = sbr.rel (%p267) target = $region44
        $region43: #{tpu_custom_call.1} parent=39 // pred_region
          %271 = dma.done %s263, 128
        $region44: #{tpu_custom_call.1} parent=39 // pred_fallthru
          _
        %s272 = sand.u32 %s25, 1
        %s273 = scalar_lea.sflag [#allocation6], %s272
        %s274 = sand.u32 %s73, 1
        %s275 = smul.addr %s274, 2
        %s276 = scalar_lea.vmem [#allocation5], %s275
        // Predicated region
        $region45: #{tpu_custom_call.1} parent=39 // pred_check
          %p277 = pneg %p86
        $region46: #{tpu_custom_call.1} parent=39 // pred_check_branch
          %279 = sbr.rel (%p277) target = $region48
        $region47: #{tpu_custom_call.1} parent=39 // pred_region
          %281 = dma.done %s273, 32
        $region48: #{tpu_custom_call.1} parent=39 // pred_fallthru
          _
        // Predicated region
        $region49: #{tpu_custom_call.1} parent=39 // pred_check
          %p282 = pneg %p107
        $region50: #{tpu_custom_call.1} parent=39 // pred_check_branch
          %284 = sbr.rel (%p282) target = $region52
        $region51: #{tpu_custom_call.1} parent=39 // pred_region
          %286 = dma.done [#allocation6], 256
        $region52: #{tpu_custom_call.1} parent=39 // pred_fallthru
          _
        %s287 = sand.u32 %s45, 1
        %s288 = scalar_lea.sflag [#allocation3], %s287
        %s289 = sand.u32 %s45, 1
        %s290 = smul.addr %s289, 8
        %s291 = scalar_lea.vmem [#allocation2], %s290
        %p292 = pneg %p58
        %p293 = pneg %p55
        %s294 = sand.u32 %s25, 1
        %s295 = scalar_lea.sflag [#allocation6], %s294
        %s296 = sand.u32 %s73, 1
        %s297 = smul.addr %s296, 2
        %s298 = scalar_lea.vmem [#allocation5], %s297
        %p299 = pneg %p86
        %p300 = pneg %p83
        %p301 = pneg %p107
        %p302 = pneg %p104
        %p303 = pneg %p128
        %p304 = pneg %p125
        %p305 = pneg %p149
        %p306 = pneg %p146
        %p307 = pneg %p177
        %p308 = pneg %p174
        %s309 = sand.u32 %s164, 1
        %s310 = scalar_lea.sflag [#allocation4], %s309
        %s311 = sand.u32 %s164, 1
        %s312 = smul.addr %s311, 8
        %s313 = scalar_lea.vmem [#allocation8], %s312
        %v317 = vld [vmem:[%s266] sm:$0xff]
        %v318 = vpack.c.bf16 %v317, %v317
        %v319 = vld [vmem:[#allocation7] sm:$0xf]
        %v320 = vld [vmem:[#allocation7 + $0x4] sm:$0xf]
        %v321 = vld [vmem:[#allocation7 + $0x8] sm:$0xf]
        %v322 = vld [vmem:[#allocation7 + $0xc] sm:$0xf]
        %v323 = vld [vmem:[%s3] sm:$0x1]
        %v325 = vperm.slane %v323, 0
        %v331 = vunpack.c.l.b16 %v319
        %v332 = vunpack.c.l.b16 %v320
        %v333 = vunpack.c.l.b16 %v321
        %v334 = vunpack.c.l.b16 %v322
        %v335 = vpack.c.b16 %v332, %v331
        %v336 = vpack.c.b16 %v334, %v333
        %vm339 = vcmask 261120
        %v341 = vsel %vm339, %v318, 0
        %343 = vmatpush.bf16.msra.mxu0 0
        %344 = vmatpush.bf16.msra.mxu0 0
        %345 = vmatpush.bf16.msra.mxu0 0
        %346 = vmatpush.bf16.msra.mxu0 0
        %347 = vmatpush.bf16.msra.mxu0 0
        %348 = vmatpush.bf16.msra.mxu0 0
        %349 = vmatpush.bf16.msra.mxu0 %v336
        %350 = vmatpush.bf16.msra.mxu0 %v335
        %351 = vmatmul.bf16.gmra.mxu0 %v341
        %v352 = vpop.f32.mrf.mxu0
        %v353 = vadd.f32 %v325, %v352
        %v354 = vpop.f32.mrf.mxu0
        %355 = vdwg.mxu0
        %v356 = vpack.c.bf16 %v353, %v353
        %358 = vrot.lane.b32.xlu0 %v353, 96
        %v359 = vpop.permute.xlu0 %358
        %361 = vxpose.xlu0.b32.start [1/16] %v359, 128
        %362 = vxpose.xlu0.b32.cont [2/16] 0.0, 128
        %363 = vxpose.xlu0.b32.cont [3/16] 0.0, 128
        %364 = vxpose.xlu0.b32.cont [4/16] 0.0, 128
        %365 = vxpose.xlu0.b32.cont [5/16] 0.0, 128
        %366 = vxpose.xlu0.b32.cont [6/16] 0.0, 128
        %367 = vxpose.xlu0.b32.cont [7/16] 0.0, 128
        %368 = vxpose.xlu0.b32.cont [8/16] 0.0, 128
        %369 = vxpose.xlu0.b32.cont [9/16] 0.0, 128
        %370 = vxpose.xlu0.b32.cont [10/16] 0.0, 128
        %371 = vxpose.xlu0.b32.cont [11/16] 0.0, 128
        %372 = vxpose.xlu0.b32.cont [12/16] 0.0, 128
        %373 = vxpose.xlu0.b32.cont [13/16] 0.0, 128
        %374 = vxpose.xlu0.b32.cont [14/16] 0.0, 128
        %375 = vxpose.xlu0.b32.cont [15/16] 0.0, 128
        %376 = vxpose.xlu0.b32.end [16/16] 0.0, 128
        %v377 = vpop.trf.xlu0
        %v378 = vpop.trf.xlu0
        %v379 = vpop.trf.xlu0
        %v380 = vpop.trf.xlu0
        %v381 = vpop.trf.xlu0
        %v382 = vpop.trf.xlu0
        %v383 = vpop.trf.xlu0
        %v384 = vpop.trf.xlu0
        %v385 = vpop.trf.xlu0
        %v386 = vpop.trf.xlu0
        %v387 = vpop.trf.xlu0
        %v388 = vpop.trf.xlu0
        %v389 = vpop.trf.xlu0
        %v390 = vpop.trf.xlu0
        %v391 = vpop.trf.xlu0
        %v392 = vpop.trf.xlu0
        %v393 = vld [vmem:[%s276] sm:$0x3]
        %vm394 = vnez %v393
        %395 = vset.pattern.permute.xlu0 36
        %396 = vperm.xlu0 %395, %v353
        %v397 = vpop.permute.xlu0 %396
        %v399 = vperm.slane %v377, 0
        %v400 = vadd.f32 %v397, %v399
        %v401 = vsel %vm394, 16843009, 0
        %v402 = vunpack.c.0.s8 %v401
        %vm403 = vcmp.ne.s32.totalorder %v402, 0
        %v404 = vsel %vm403, %v400, 0.0
        %v405 = vmul.f32 %v404, 0.2
        %v406 = vmax.f32 %v404, %v405
        %vm407 = vcmask 64512
        %v408 = vsel %vm407, %v406, -inf
        %409 = vmax.xlane.f32.xlu0 %v408
        %v410 = vpop.xlane.xlu0 %409
        %v411 = vsub.f32 %v406, %v410
        %v412 = vmul.f32 %v411, 1.442695
        %v413 = vpow.pop %v412
        %v414 = vsel %vm407, %v413, 0.0
        %415 = vadd.xlane.f32.xlu0 %v414
        %v416 = vpop.xlane.xlu0 %415
        %v417 = vpack.c.bf16 %v413, %v413
        %v419 = vsel %vm407, %v417, 0
        %vm421 = vcmask 1043456
        %v423 = vsel %vm421, %v356, 0
        %425 = vmatpush.bf16.msra.mxu0 0
        %426 = vmatpush.bf16.msra.mxu0 0
        %427 = vmatpush.bf16.msra.mxu0 0
        %428 = vmatpush.bf16.msra.mxu0 0
        %429 = vmatpush.bf16.msra.mxu0 0
        %430 = vmatpush.bf16.msra.mxu0 0
        %431 = vmatpush.bf16.msra.mxu0 0
        %432 = vmatpush.bf16.msra.mxu0 %v423
        %433 = vmatmul.bf16.gmra.mxu0 %v419
        %v434 = vpop.f32.mrf.mxu0
        %v435 = vadd.f32 0.0, %v434
        %v436 = vpop.f32.mrf.mxu0
        %437 = vdwg.mxu0
        %438 = vset.pattern.permute.xlu0 37
        %439 = vperm.xlu0 %438, %v353
        %v440 = vpop.permute.xlu0 %439
        %v442 = vperm.slane %v377, 1
        %v443 = vadd.f32 %v440, %v442
        %v444 = vsel %vm403, %v443, 0.0
        %v445 = vmul.f32 %v444, 0.2
        %v446 = vmax.f32 %v444, %v445
        %v447 = vsel %vm407, %v446, -inf
        %448 = vmax.xlane.f32.xlu0 %v447
        %v449 = vpop.xlane.xlu0 %448
        %v450 = vsub.f32 %v446, %v449
        %v451 = vmul.f32 %v450, 1.442695
        %v452 = vpow.pop %v451
        %v453 = vsel %vm407, %v452, 0.0
        %454 = vadd.xlane.f32.xlu0 %v453
        %v455 = vpop.xlane.xlu0 %454
        %v456 = vpack.c.bf16 %v452, %v452
        %v458 = vunpack.c.l.b16 %v356
        %v459 = vpack.c.b16 %v458, %v458
        %460 = vrot.lane.b32.xlu0 %v459, 120
        %v461 = vpop.permute.xlu0 %460
        %v463 = vsel %vm407, %v456, 0
        %v466 = vsel %vm421, %v461, 0
        %468 = vmatpush.bf16.msra.mxu0 0
        %469 = vmatpush.bf16.msra.mxu0 0
        %470 = vmatpush.bf16.msra.mxu0 0
        %471 = vmatpush.bf16.msra.mxu0 0
        %472 = vmatpush.bf16.msra.mxu0 0
        %473 = vmatpush.bf16.msra.mxu0 0
        %474 = vmatpush.bf16.msra.mxu0 0
        %475 = vmatpush.bf16.msra.mxu0 %v466
        %476 = vmatmul.bf16.gmra.mxu0 %v463
        %v477 = vpop.f32.mrf.mxu0
        %v478 = vadd.f32 0.0, %v477
        %v479 = vpop.f32.mrf.mxu0
        %480 = vdwg.mxu0
        %481 = vset.pattern.permute.xlu0 38
        %482 = vperm.xlu0 %481, %v353
        %v483 = vpop.permute.xlu0 %482
        %v485 = vperm.slane %v377, 2
        %v486 = vadd.f32 %v483, %v485
        %v487 = vsel %vm403, %v486, 0.0
        %v488 = vmul.f32 %v487, 0.2
        %v489 = vmax.f32 %v487, %v488
        %v490 = vsel %vm407, %v489, -inf
        %491 = vmax.xlane.f32.xlu0 %v490
        %v492 = vpop.xlane.xlu0 %491
        %v493 = vsub.f32 %v489, %v492
        %v494 = vmul.f32 %v493, 1.442695
        %v495 = vpow.pop %v494
        %v496 = vsel %vm407, %v495, 0.0
        %497 = vadd.xlane.f32.xlu0 %v496
        %v498 = vpop.xlane.xlu0 %497
        %v499 = vpack.c.bf16 %v495, %v495
        %500 = vrot.lane.b32.xlu0 %v459, 112
        %v501 = vpop.permute.xlu0 %500
        %v503 = vsel %vm407, %v499, 0
        %v506 = vsel %vm421, %v501, 0
        %508 = vmatpush.bf16.msra.mxu0 0
        %509 = vmatpush.bf16.msra.mxu0 0
        %510 = vmatpush.bf16.msra.mxu0 0
        %511 = vmatpush.bf16.msra.mxu0 0
        %512 = vmatpush.bf16.msra.mxu0 0
        %513 = vmatpush.bf16.msra.mxu0 0
        %514 = vmatpush.bf16.msra.mxu0 0
        %515 = vmatpush.bf16.msra.mxu0 %v506
        %516 = vmatmul.bf16.gmra.mxu0 %v503
        %v517 = vpop.f32.mrf.mxu0
        %v518 = vadd.f32 0.0, %v517
        %v519 = vpop.f32.mrf.mxu0
        %520 = vdwg.mxu0
        %521 = vset.pattern.permute.xlu0 39
        %522 = vperm.xlu0 %521, %v353
        %v523 = vpop.permute.xlu0 %522
        %v525 = vperm.slane %v377, 3
        %v526 = vadd.f32 %v523, %v525
        %v527 = vsel %vm403, %v526, 0.0
        %v528 = vmul.f32 %v527, 0.2
        %v529 = vmax.f32 %v527, %v528
        %v530 = vsel %vm407, %v529, -inf
        %531 = vmax.xlane.f32.xlu0 %v530
        %v532 = vpop.xlane.xlu0 %531
        %v533 = vsub.f32 %v529, %v532
        %v534 = vmul.f32 %v533, 1.442695
        %v535 = vpow.pop %v534
        %v536 = vsel %vm407, %v535, 0.0
        %537 = vadd.xlane.f32.xlu0 %v536
        %v538 = vpop.xlane.xlu0 %537
        %v539 = vpack.c.bf16 %v535, %v535
        %540 = vrot.lane.b32.xlu0 %v459, 104
        %v541 = vpop.permute.xlu0 %540
        %v543 = vsel %vm407, %v539, 0
        %v546 = vsel %vm421, %v541, 0
        %548 = vmatpush.bf16.msra.mxu0 0
        %549 = vmatpush.bf16.msra.mxu0 0
        %550 = vmatpush.bf16.msra.mxu0 0
        %551 = vmatpush.bf16.msra.mxu0 0
        %552 = vmatpush.bf16.msra.mxu0 0
        %553 = vmatpush.bf16.msra.mxu0 0
        %554 = vmatpush.bf16.msra.mxu0 0
        %555 = vmatpush.bf16.msra.mxu0 %v546
        %556 = vmatmul.bf16.gmra.mxu0 %v543
        %v557 = vpop.f32.mrf.mxu0
        %v558 = vadd.f32 0.0, %v557
        %v559 = vpop.f32.mrf.mxu0
        %560 = vdwg.mxu0
        %562 = vrot.lane.b32.xlu0 %v478, 8
        %v563 = vpop.permute.xlu0 %562
        %566 = vrot.lane.b32.xlu0 %v518, 16
        %v567 = vpop.permute.xlu0 %566
        %570 = vrot.lane.b32.xlu0 %v558, 24
        %v571 = vpop.permute.xlu0 %570
        %v573 = vsel %vm407, %v435, %v563
        %vm574 = vcmask 130048
        %v575 = vsel %vm574, %v573, %v567
        %vm576 = vcmask 195584
        %v577 = vsel %vm576, %v575, %v571
        %vm578 = vcmask 7168
        %v579 = vsel %vm578, %v416, %v455
        %vm580 = vcmask 15360
        %v581 = vsel %vm580, %v579, %v498
        %vm582 = vcmask 23552
        %v583 = vsel %vm582, %v581, %v538
        %v584 = vrcp.pop %v583
        %586 = vset.pattern.permute.xlu0 0
        %587 = vperm.xlu0 %586, %v584
        %v588 = vpop.permute.xlu0 %587
        %590 = vset.pattern.permute.xlu0 1
        %591 = vperm.xlu0 %590, %v584
        %v592 = vpop.permute.xlu0 %591
        %594 = vset.pattern.permute.xlu0 2
        %595 = vperm.xlu0 %594, %v584
        %v596 = vpop.permute.xlu0 %595
        %598 = vset.pattern.permute.xlu0 3
        %599 = vperm.xlu0 %598, %v584
        %v600 = vpop.permute.xlu0 %599
        %v602 = vsel %vm407, %v588, %v592
        %v603 = vsel %vm574, %v602, %v596
        %v604 = vsel %vm576, %v603, %v600
        %v605 = vmul.f32 %v577, %v604
        %v606 = vadd.f32 %v605, %v353
        %v607 = vld [vmem:[%s4] sm:$0x1]
        %v609 = vperm.slane %v607, 0
        %v611 = vadd.f32 %v606, %v609
        %612 = vst.msk [vmem:[%s313] sm:$0xff] %vm339, %v611
        %s613 = sand.u32 %s164, 1
        %s614 = scalar_lea.sflag [#allocation4], %s613
        %s615 = sand.u32 %s164, 1
        %s616 = smul.addr %s615, 8
        %s617 = scalar_lea.vmem [#allocation8], %s616
        // Predicated region
        $region53: #{tpu_custom_call.1} parent=39 // pred_check
          %p618 = pneg %p174
        $region54: #{tpu_custom_call.1} parent=39 // pred_check_branch
          %620 = sbr.rel (%p618) target = $region56
        $region55: #{tpu_custom_call.1} parent=39 // pred_region
          %622 = vsyncadd %s614, 0
          %s623 = sadd.s32 %s30, %s29
          %s624 = smul.addr %s623, 8
          %s625 = scalar_lea.hbm %s5, %s624
          %s627 = sshll.u32 %s617, 4
          %s628 = int_to_ptr.vmem [resolvable:$true] %s627
          %s629 = sshll.u32 %s625, 4
          %s630 = int_to_ptr.hbm [resolvable:$true] %s629
          %632 = dma.vmem_to_hbm [thread:$0]  %s628, 128, %s630, %s614
        $region56: #{tpu_custom_call.1} parent=39 // pred_fallthru
          _
      $region40: #{tpu_custom_call.1} parent=5 // pred_fallthru
        _
      %p633 = scmp.le.s32.totalorder 2, %s20
      // Predicated region
      $region57: #{tpu_custom_call.1} parent=5 // pred_check
        %p634 = pneg %p633
      $region58: #{tpu_custom_call.1} parent=5 // pred_check_branch
        %636 = sbr.rel (%p634) target = $region60
      $region59: #{tpu_custom_call.1} parent=5 // pred_region
        %s637 = ssub.s32 %s20, 2
        // Predicated region
        $region61: #{tpu_custom_call.1} parent=59 // pred_check
          %p638 = pneg %p180
        $region62: #{tpu_custom_call.1} parent=59 // pred_check_branch
          %640 = sbr.rel (%p638) target = $region64
        $region63: #{tpu_custom_call.1} parent=59 // pred_region
          %s641 = sand.u32 %s165, 1
          %s642 = scalar_lea.sflag [#allocation4], %s641
          %s643 = sand.u32 %s165, 1
          %s644 = smul.addr %s643, 8
          %s645 = scalar_lea.vmem [#allocation8], %s644
          %647 = dma.done %s642, 128
        $region64: #{tpu_custom_call.1} parent=59 // pred_fallthru
          _
      $region60: #{tpu_custom_call.1} parent=5 // pred_fallthru
        _
    $region6: #{tpu_custom_call.1} parent=1 // loop_footer
      %s24 = sadd.s32 1, %s20
    $region7: #{tpu_custom_call.1} parent=1 // loop_footer_branch
      %19 = sbr.rel target = $region3
    $region8: #{tpu_custom_call.1} parent=1 // loop_exit
      _
    %648 = vsyncpa [#allocation3], 1
    %s649 = scalar_lea.sflag [#allocation3], 1
    %650 = vsyncpa %s649, 1
    %651 = vsyncpa [#allocation6], 1
    %s652 = scalar_lea.sflag [#allocation6], 1
    %653 = vsyncpa %s652, 1
    %654 = vsyncpa [#allocation4], 1
    %s655 = scalar_lea.sflag [#allocation4], 1
    %656 = vsyncpa %s655, 1

// kernel: tpu_custom_call.1
$region0: #{tpu_custom_call.1}
  #allocation0 [shape = 'u32[]', space=smem, size = 0x4, offset = 0x4, fixed_abs, tag = 'smem constant byte address 0x4 - core index']
  #allocation1 [shape = 'u32[72,128]{1,0:T(1,128)}', space=vmem, size = 0x9000, scoped, tag = 'internal scratch']
  %s0 = inlined_call_operand.hbm [shape: f32[2,8,32], index: 0, kind: input, shape index: {}]
  %s1 = inlined_call_operand.hbm [shape: s8[2,8,8], index: 1, kind: input, shape index: {}]
  %s2 = inlined_call_operand.hbm [shape: bf16[32,40], index: 2, kind: input, shape index: {}]
  %s3 = inlined_call_operand.vmem [shape: f32[1,40], index: 3, kind: input, shape index: {}]
  %s4 = inlined_call_operand.vmem [shape: f32[1,32], index: 4, kind: input, shape index: {}]
  %s5 = inlined_call_operand.hbm [shape: f32[2,8,32], index: 5, kind: output, shape index: {}]
  %s6 = sld [smem:[#allocation0]]
  $region65: #{tpu_custom_call.1} parent=0
    _
  %s8 = ssub.s32 1, %s6
  %s9 = scalar_select 0, %s8, %s6
  $region1: #{tpu_custom_call.1} parent=0
    #allocation2 [shape = 'u8[8192]{0}', space=vmem, size = 0x2000, scoped, tag = 'input window, operand 0']
    #allocation3 [shape = 's32[2]{0}', space=sflag, size = 0x8, scoped, tag = 'scoped memory for tpu_custom_call.1']
    #allocation4 [shape = 's32[2]{0}', space=sflag, size = 0x8, scoped, tag = 'scoped memory for tpu_custom_call.1']
    #allocation5 [shape = 'u8[2048]{0}', space=vmem, size = 0x800, scoped, tag = 'input window, operand 1']
    #allocation6 [shape = 's32[2]{0}', space=sflag, size = 0x8, scoped, tag = 'scoped memory for tpu_custom_call.1']
    #allocation7 [shape = 'u8[8192]{0}', space=vmem, size = 0x2000, scoped, tag = 'input window, operand 2, single buffered']
    #allocation8 [shape = 'u8[8192]{0}', space=vmem, size = 0x2000, scoped, tag = 'output window, operand 0']
    %10 = vsyncpa [#allocation3], 0
    %s11 = scalar_lea.sflag [#allocation3], 1
    %12 = vsyncpa %s11, 0
    %13 = vsyncpa [#allocation6], 0
    %s14 = scalar_lea.sflag [#allocation6], 1
    %15 = vsyncpa %s14, 0
    %16 = vsyncpa [#allocation4], 0
    %s17 = scalar_lea.sflag [#allocation4], 1
    %18 = vsyncpa %s17, 0
    loop: start=0, step=1, limit=4
    $region2: #{tpu_custom_call.1} parent=1 // loop_pre_header
      _
    $region3: #{tpu_custom_call.1} parent=1 // loop_header
      %s20 = sphi 0, %s24
      %p21 = scmp.ge.s32.totalorder %s20, 4
      %s27 = sphi 0, %s39
      %s28 = sphi 0, %s35
      %s29 = sphi 0, %s27
      %s30 = sphi 0, %s28
      %s31 = sphi 0, %s29
      %s32 = sphi 0, %s30
      %s42 = sphi 0, %s44
      %s45 = sphi 0, %s42
      %s46 = sphi 0, %s45
      %s62 = sphi 0, %s46
      %s70 = sphi 0, %s72
      %s73 = sphi 0, %s70
      %s74 = sphi 0, %s73
      %s90 = sphi 0, %s74
      %s94 = sphi 0, %s94
      %s96 = sphi 0, %s94
      %s97 = sphi 0, %s96
      %s111 = sphi 0, %s97
      %s115 = sphi 0, %s115
      %s117 = sphi 0, %s115
      %s118 = sphi 0, %s117
      %s132 = sphi 0, %s118
      %s136 = sphi 0, %s136
      %s138 = sphi 0, %s136
      %s139 = sphi 0, %s138
      %s153 = sphi 0, %s139
      %s161 = sphi 0, %s163
      %s164 = sphi 0, %s161
      %s165 = sphi 0, %s164
      %s181 = sphi 0, %s165
    $region4: #{tpu_custom_call.1} parent=1 // loop_header_branch
      %23 = sbr.rel (%p21) target = $region8
    $region5: #{tpu_custom_call.1} parent=1 // loop_body
      %s25 = ssub.s32 %s20, 1
      %s26 = ssub.s32 %s20, 2
      %s33 = sadd.s32 1, %s28
      %p34 = scmp.ge.s32.totalorder %s33, 1
      %s35 = scalar_select %p34, 0, %s33
      %s36 = sadd.s32 1, %s27
      %s37 = scalar_select %p34, %s36, %s27
      %p38 = scmp.ge.s32.totalorder %s37, 2
      %s39 = scalar_select %p38, 0, %s37
      %s40 = ssub.s32 %s27, %s39
      %p41 = scmp.eq.s32.totalorder %s40, 0
      %s43 = sadd.s32 %s42, 1
      %s44 = scalar_select %p41, %s42, %s43
      %p47 = pneg %p41
      %p48 = scmp.eq.s32.totalorder %s20, 1
      %p49 = por %p47, %p48
      %p50 = scmp.ne.s32.totalorder %s42, %s45
      %p51 = scmp.eq.s32.totalorder %s20, 0
      %p52 = por %p50, %p51
      %p53 = scmp.ne.s32.totalorder %s42, %s45
      %p54 = scmp.eq.s32.totalorder %s25, 1
      %p55 = por %p53, %p54
      %p56 = scmp.ne.s32.totalorder %s45, %s46
      %p57 = scmp.eq.s32.totalorder %s25, 0
      %p58 = por %p56, %p57
      %p59 = scmp.ne.s32.totalorder %s45, %s46
      %p60 = scmp.eq.s32.totalorder %s26, 1
      %p61 = por %p59, %p60
      %p63 = scmp.ne.s32.totalorder %s46, %s62
      %p64 = scmp.eq.s32.totalorder %s26, 0
      %p65 = por %p63, %p64
      %s66 = ssub.s32 %s27, %s39
      %s67 = ssub.s32 %s28, %s35
      %s68 = sor.u32 %s66, %s67
      %p69 = scmp.eq.s32.totalorder %s68, 0
      %s71 = sadd.s32 %s70, 1
      %s72 = scalar_select %p69, %s70, %s71
      %p75 = pneg %p69
      %p76 = scmp.eq.s32.totalorder %s20, 1
      %p77 = por %p75, %p76
      %p78 = scmp.ne.s32.totalorder %s70, %s73
      %p79 = scmp.eq.s32.totalorder %s20, 0
      %p80 = por %p78, %p79
      %p81 = scmp.ne.s32.totalorder %s70, %s73
      %p82 = scmp.eq.s32.totalorder %s25, 1
      %p83 = por %p81, %p82
      %p84 = scmp.ne.s32.totalorder %s73, %s74
      %p85 = scmp.eq.s32.totalorder %s25, 0
      %p86 = por %p84, %p85
      %p87 = scmp.ne.s32.totalorder %s73, %s74
      %p88 = scmp.eq.s32.totalorder %s26, 1
      %p89 = por %p87, %p88
      %p91 = scmp.ne.s32.totalorder %s74, %s90
      %p92 = scmp.eq.s32.totalorder %s26, 0
      %p93 = por %p91, %p92
      %s95 = sadd.s32 %s94, 1
      %p98 = scmp.eq.s32.totalorder %s20, 1
      %p99 = scmp.ne.s32.totalorder %s94, %s96
      %p100 = scmp.eq.s32.totalorder %s20, 0
      %p101 = por %p99, %p100
      %p102 = scmp.ne.s32.totalorder %s94, %s96
      %p103 = scmp.eq.s32.totalorder %s25, 1
      %p104 = por %p102, %p103
      %p105 = scmp.ne.s32.totalorder %s96, %s97
      %p106 = scmp.eq.s32.totalorder %s25, 0
      %p107 = por %p105, %p106
      %p108 = scmp.ne.s32.totalorder %s96, %s97
      %p109 = scmp.eq.s32.totalorder %s26, 1
      %p110 = por %p108, %p109
      %p112 = scmp.ne.s32.totalorder %s97, %s111
      %p113 = scmp.eq.s32.totalorder %s26, 0
      %p114 = por %p112, %p113
      %s116 = sadd.s32 %s115, 1
      %p119 = scmp.eq.s32.totalorder %s20, 1
      %p120 = scmp.ne.s32.totalorder %s115, %s117
      %p121 = scmp.eq.s32.totalorder %s20, 0
      %p122 = por %p120, %p121
      %p123 = scmp.ne.s32.totalorder %s115, %s117
      %p124 = scmp.eq.s32.totalorder %s25, 1
      %p125 = por %p123, %p124
      %p126 = scmp.ne.s32.totalorder %s117, %s118
      %p127 = scmp.eq.s32.totalorder %s25, 0
      %p128 = por %p126, %p127
      %p129 = scmp.ne.s32.totalorder %s117, %s118
      %p130 = scmp.eq.s32.totalorder %s26, 1
      %p131 = por %p129, %p130
      %p133 = scmp.ne.s32.totalorder %s118, %s132
      %p134 = scmp.eq.s32.totalorder %s26, 0
      %p135 = por %p133, %p134
      %s137 = sadd.s32 %s136, 1
      %p140 = scmp.eq.s32.totalorder %s20, 1
      %p141 = scmp.ne.s32.totalorder %s136, %s138
      %p142 = scmp.eq.s32.totalorder %s20, 0
      %p143 = por %p141, %p142
      %p144 = scmp.ne.s32.totalorder %s136, %s138
      %p145 = scmp.eq.s32.totalorder %s25, 1
      %p146 = por %p144, %p145
      %p147 = scmp.ne.s32.totalorder %s138, %s139
      %p148 = scmp.eq.s32.totalorder %s25, 0
      %p149 = por %p147, %p148
      %p150 = scmp.ne.s32.totalorder %s138, %s139
      %p151 = scmp.eq.s32.totalorder %s26, 1
      %p152 = por %p150, %p151
      %p154 = scmp.ne.s32.totalorder %s139, %s153
      %p155 = scmp.eq.s32.totalorder %s26, 0
      %p156 = por %p154, %p155
      %s157 = ssub.s32 %s27, %s39
      %s158 = ssub.s32 %s28, %s35
      %s159 = sor.u32 %s157, %s158
      %p160 = scmp.eq.s32.totalorder %s159, 0
      %s162 = sadd.s32 %s161, 1
      %s163 = scalar_select %p160, %s161, %s162
      %p166 = pneg %p160
      %p167 = scmp.eq.s32.totalorder %s20, 1
      %p168 = por %p166, %p167
      %p169 = scmp.ne.s32.totalorder %s161, %s164
      %p170 = scmp.eq.s32.totalorder %s20, 0
      %p171 = por %p169, %p170
      %p172 = scmp.ne.s32.totalorder %s161, %s164
      %p173 = scmp.eq.s32.totalorder %s25, 1
      %p174 = por %p172, %p173
      %p175 = scmp.ne.s32.totalorder %s164, %s165
      %p176 = scmp.eq.s32.totalorder %s25, 0
      %p177 = por %p175, %p176
      %p178 = scmp.ne.s32.totalorder %s164, %s165
      %p179 = scmp.eq.s32.totalorder %s26, 1
      %p180 = por %p178, %p179
      %p182 = scmp.ne.s32.totalorder %s165, %s181
      %p183 = scmp.eq.s32.totalorder %s26, 0
      %p184 = por %p182, %p183
      %p185 = scmp.le.s32.totalorder 1, %s20
      %p186 = scmp.lt.s32.totalorder %s20, 3
      %p187 = pnand %p185, %p186
      %p188 = pneg %p187
      // Predicated region
      $region9: #{tpu_custom_call.1} parent=5 // pred_check
        _
      $region10: #{tpu_custom_call.1} parent=5 // pred_check_branch
        %190 = sbr.rel (%p187) target = $region12
      $region11: #{tpu_custom_call.1} parent=5 // pred_region
        %s191 = ssub.s32 %s20, 1
        // Predicated region
        $region13: #{tpu_custom_call.1} parent=11 // pred_check
          %p192 = pneg %p107
        $region14: #{tpu_custom_call.1} parent=11 // pred_check_branch
          %194 = sbr.rel (%p192) target = $region16
        $region15: #{tpu_custom_call.1} parent=11 // pred_region
          %196 = vsyncadd [#allocation6], 0
          %s197 = sshll.u32 %s2, 4
          %s198 = int_to_ptr.hbm [resolvable:$true] %s197
          %s199 = sshll.u32 [#allocation7], 4
          %s200 = int_to_ptr.vmem [resolvable:$true] %s199
          %205 = dma.hbm_to_vmem [thread:$0]  %s198, 256, %s200, [#allocation6], 64, 64, 4
        $region16: #{tpu_custom_call.1} parent=11 // pred_fallthru
          _
        // Predicated region
        $region17: #{tpu_custom_call.1} parent=11 // pred_check
          %p206 = pneg %p128
        $region18: #{tpu_custom_call.1} parent=11 // pred_check_branch
          %208 = sbr.rel (%p206) target = $region20
        $region19: #{tpu_custom_call.1} parent=11 // pred_region
          _
        $region20: #{tpu_custom_call.1} parent=11 // pred_fallthru
          _
        // Predicated region
        $region21: #{tpu_custom_call.1} parent=11 // pred_check
          %p209 = pneg %p149
        $region22: #{tpu_custom_call.1} parent=11 // pred_check_branch
          %211 = sbr.rel (%p209) target = $region24
        $region23: #{tpu_custom_call.1} parent=11 // pred_region
          _
        $region24: #{tpu_custom_call.1} parent=11 // pred_fallthru
          _
      $region12: #{tpu_custom_call.1} parent=5 // pred_fallthru
        _
      %p212 = scmp.lt.s32.totalorder %s20, 2
      // Predicated region
      $region25: #{tpu_custom_call.1} parent=5 // pred_check
        %p213 = pneg %p212
      $region26: #{tpu_custom_call.1} parent=5 // pred_check_branch
        %215 = sbr.rel (%p213) target = $region28
      $region27: #{tpu_custom_call.1} parent=5 // pred_region
        // Predicated region
        $region29: #{tpu_custom_call.1} parent=27 // pred_check
          %p216 = pneg %p52
        $region30: #{tpu_custom_call.1} parent=27 // pred_check_branch
          %218 = sbr.rel (%p216) target = $region32
        $region31: #{tpu_custom_call.1} parent=27 // pred_region
          %s219 = sand.u32 %s42, 1
          %s220 = scalar_lea.sflag [#allocation3], %s219
          %s221 = sand.u32 %s42, 1
          %s222 = smul.addr %s221, 8
          %s223 = scalar_lea.vmem [#allocation2], %s222
          %225 = vsyncadd %s220, 0
          %s226 = smul.addr %s27, 8
          %s227 = scalar_lea.hbm %s0, %s226
          %s229 = sshll.u32 %s227, 4
          %s230 = int_to_ptr.hbm [resolvable:$true] %s229
          %s231 = sshll.u32 %s223, 4
          %s232 = int_to_ptr.vmem [resolvable:$true] %s231
          %234 = dma.hbm_to_vmem [thread:$0]  %s230, 128, %s232, %s220
        $region32: #{tpu_custom_call.1} parent=27 // pred_fallthru
          _
        // Predicated region
        $region33: #{tpu_custom_call.1} parent=27 // pred_check
          %p235 = pneg %p80
        $region34: #{tpu_custom_call.1} parent=27 // pred_check_branch
          %237 = sbr.rel (%p235) target = $region36
        $region35: #{tpu_custom_call.1} parent=27 // pred_region
          %s238 = sand.u32 %s20, 1
          %s239 = scalar_lea.sflag [#allocation6], %s238
          %s240 = sand.u32 %s70, 1
          %s241 = smul.addr %s240, 2
          %s242 = scalar_lea.vmem [#allocation5], %s241
          %244 = vsyncadd %s239, 0
          %s245 = sadd.s32 %s28, %s27
          %s246 = smul.addr %s245, 2
          %s247 = scalar_lea.hbm %s1, %s246
          %s249 = sshll.u32 %s247, 4
          %s250 = int_to_ptr.hbm [resolvable:$true] %s249
          %s251 = sshll.u32 %s242, 4
          %s252 = int_to_ptr.vmem [resolvable:$true] %s251
          %254 = dma.hbm_to_vmem [thread:$0]  %s250, 32, %s252, %s239
        $region36: #{tpu_custom_call.1} parent=27 // pred_fallthru
          _
      $region28: #{tpu_custom_call.1} parent=5 // pred_fallthru
        _
      %p255 = scmp.le.s32.totalorder 1, %s20
      %p256 = scmp.lt.s32.totalorder %s20, 3
      %p257 = pnand %p255, %p256
      %p258 = pneg %p257
      // Predicated region
      $region37: #{tpu_custom_call.1} parent=5 // pred_check
        _
      $region38: #{tpu_custom_call.1} parent=5 // pred_check_branch
        %260 = sbr.rel (%p257) target = $region40
      $region39: #{tpu_custom_call.1} parent=5 // pred_region
        %s261 = ssub.s32 %s20, 1
        %s262 = sand.u32 %s45, 1
        %s263 = scalar_lea.sflag [#allocation3], %s262
        %s264 = sand.u32 %s45, 1
        %s265 = smul.addr %s264, 8
        %s266 = scalar_lea.vmem [#allocation2], %s265
        // Predicated region
        $region41: #{tpu_custom_call.1} parent=39 // pred_check
          %p267 = pneg %p58
        $region42: #{tpu_custom_call.1} parent=39 // pred_check_branch
          %269 = sbr.rel (%p267) target = $region44
        $region43: #{tpu_custom_call.1} parent=39 // pred_region
          %271 = dma.done %s263, 128
        $region44: #{tpu_custom_call.1} parent=39 // pred_fallthru
          _
        %s272 = sand.u32 %s25, 1
        %s273 = scalar_lea.sflag [#allocation6], %s272
        %s274 = sand.u32 %s73, 1
        %s275 = smul.addr %s274, 2
        %s276 = scalar_lea.vmem [#allocation5], %s275
        // Predicated region
        $region45: #{tpu_custom_call.1} parent=39 // pred_check
          %p277 = pneg %p86
        $region46: #{tpu_custom_call.1} parent=39 // pred_check_branch
          %279 = sbr.rel (%p277) target = $region48
        $region47: #{tpu_custom_call.1} parent=39 // pred_region
          %281 = dma.done %s273, 32
        $region48: #{tpu_custom_call.1} parent=39 // pred_fallthru
          _
        // Predicated region
        $region49: #{tpu_custom_call.1} parent=39 // pred_check
          %p282 = pneg %p107
        $region50: #{tpu_custom_call.1} parent=39 // pred_check_branch
          %284 = sbr.rel (%p282) target = $region52
        $region51: #{tpu_custom_call.1} parent=39 // pred_region
          %286 = dma.done [#allocation6], 256
        $region52: #{tpu_custom_call.1} parent=39 // pred_fallthru
          _
        %s287 = sand.u32 %s45, 1
        %s288 = scalar_lea.sflag [#allocation3], %s287
        %s289 = sand.u32 %s45, 1
        %s290 = smul.addr %s289, 8
        %s291 = scalar_lea.vmem [#allocation2], %s290
        %p292 = pneg %p58
        %p293 = pneg %p55
        %s294 = sand.u32 %s25, 1
        %s295 = scalar_lea.sflag [#allocation6], %s294
        %s296 = sand.u32 %s73, 1
        %s297 = smul.addr %s296, 2
        %s298 = scalar_lea.vmem [#allocation5], %s297
        %p299 = pneg %p86
        %p300 = pneg %p83
        %p301 = pneg %p107
        %p302 = pneg %p104
        %p303 = pneg %p128
        %p304 = pneg %p125
        %p305 = pneg %p149
        %p306 = pneg %p146
        %p307 = pneg %p177
        %p308 = pneg %p174
        %s309 = sand.u32 %s164, 1
        %s310 = scalar_lea.sflag [#allocation4], %s309
        %s311 = sand.u32 %s164, 1
        %s312 = smul.addr %s311, 8
        %s313 = scalar_lea.vmem [#allocation8], %s312
        %v317 = vld [vmem:[%s266] sm:$0xff]
        %v318 = vpack.c.bf16 %v317, %v317
        %v319 = vld [vmem:[#allocation7] sm:$0xf]
        %v320 = vld [vmem:[#allocation7 + $0x4] sm:$0xf]
        %v321 = vld [vmem:[#allocation7 + $0x8] sm:$0xf]
        %v322 = vld [vmem:[#allocation7 + $0xc] sm:$0xf]
        %v323 = vld [vmem:[%s3] sm:$0x1]
        %v325 = vperm.slane %v323, 0
        %v331 = vunpack.c.l.b16 %v319
        %v332 = vunpack.c.l.b16 %v320
        %v333 = vunpack.c.l.b16 %v321
        %v334 = vunpack.c.l.b16 %v322
        %v335 = vpack.c.b16 %v332, %v331
        %v336 = vpack.c.b16 %v334, %v333
        %vm339 = vcmask 261120
        %v341 = vsel %vm339, %v318, 0
        %343 = vmatpush.bf16.msra.mxu0 0
        %344 = vmatpush.bf16.msra.mxu0 0
        %345 = vmatpush.bf16.msra.mxu0 0
        %346 = vmatpush.bf16.msra.mxu0 0
        %347 = vmatpush.bf16.msra.mxu0 0
        %348 = vmatpush.bf16.msra.mxu0 0
        %349 = vmatpush.bf16.msra.mxu0 %v336
        %350 = vmatpush.bf16.msra.mxu0 %v335
        %351 = vmatmul.bf16.gmra.mxu0 %v341
        %v352 = vpop.f32.mrf.mxu0
        %v353 = vadd.f32 %v325, %v352
        %v354 = vpop.f32.mrf.mxu0
        %355 = vdwg.mxu0
        %v356 = vpack.c.bf16 %v353, %v353
        %358 = vrot.lane.b32.xlu0 %v353, 96
        %v359 = vpop.permute.xlu0 %358
        %361 = vxpose.xlu0.b32.start [1/16] %v359, 128
        %362 = vxpose.xlu0.b32.cont [2/16] 0.0, 128
        %363 = vxpose.xlu0.b32.cont [3/16] 0.0, 128
        %364 = vxpose.xlu0.b32.cont [4/16] 0.0, 128
        %365 = vxpose.xlu0.b32.cont [5/16] 0.0, 128
        %366 = vxpose.xlu0.b32.cont [6/16] 0.0, 128
        %367 = vxpose.xlu0.b32.cont [7/16] 0.0, 128
        %368 = vxpose.xlu0.b32.cont [8/16] 0.0, 128
        %369 = vxpose.xlu0.b32.cont [9/16] 0.0, 128
        %370 = vxpose.xlu0.b32.cont [10/16] 0.0, 128
        %371 = vxpose.xlu0.b32.cont [11/16] 0.0, 128
        %372 = vxpose.xlu0.b32.cont [12/16] 0.0, 128
        %373 = vxpose.xlu0.b32.cont [13/16] 0.0, 128
        %374 = vxpose.xlu0.b32.cont [14/16] 0.0, 128
        %375 = vxpose.xlu0.b32.cont [15/16] 0.0, 128
        %376 = vxpose.xlu0.b32.end [16/16] 0.0, 128
        %v377 = vpop.trf.xlu0
        %v378 = vpop.trf.xlu0
        %v379 = vpop.trf.xlu0
        %v380 = vpop.trf.xlu0
        %v381 = vpop.trf.xlu0
        %v382 = vpop.trf.xlu0
        %v383 = vpop.trf.xlu0
        %v384 = vpop.trf.xlu0
        %v385 = vpop.trf.xlu0
        %v386 = vpop.trf.xlu0
        %v387 = vpop.trf.xlu0
        %v388 = vpop.trf.xlu0
        %v389 = vpop.trf.xlu0
        %v390 = vpop.trf.xlu0
        %v391 = vpop.trf.xlu0
        %v392 = vpop.trf.xlu0
        %v393 = vld [vmem:[%s276] sm:$0x3]
        %vm394 = vnez %v393
        %395 = vset.pattern.permute.xlu0 36
        %396 = vperm.xlu0 %395, %v353
        %v397 = vpop.permute.xlu0 %396
        %v399 = vperm.slane %v377, 0
        %v400 = vadd.f32 %v397, %v399
        %v401 = vsel %vm394, 16843009, 0
        %v402 = vunpack.c.0.s8 %v401
        %vm403 = vcmp.ne.s32.totalorder %v402, 0
        %v404 = vsel %vm403, %v400, 0.0
        %v405 = vmul.f32 %v404, 0.2
        %v406 = vmax.f32 %v404, %v405
        %vm407 = vcmask 64512
        %v408 = vsel %vm407, %v406, -inf
        %409 = vmax.xlane.f32.xlu0 %v408
        %v410 = vpop.xlane.xlu0 %409
        %v411 = vsub.f32 %v406, %v410
        %v412 = vmul.f32 %v411, 1.442695
        %v413 = vpow.pop %v412
        %v414 = vsel %vm407, %v413, 0.0
        %415 = vadd.xlane.f32.xlu0 %v414
        %v416 = vpop.xlane.xlu0 %415
        %v417 = vpack.c.bf16 %v413, %v413
        %v419 = vsel %vm407, %v417, 0
        %vm421 = vcmask 1043456
        %v423 = vsel %vm421, %v356, 0
        %425 = vmatpush.bf16.msra.mxu0 0
        %426 = vmatpush.bf16.msra.mxu0 0
        %427 = vmatpush.bf16.msra.mxu0 0
        %428 = vmatpush.bf16.msra.mxu0 0
        %429 = vmatpush.bf16.msra.mxu0 0
        %430 = vmatpush.bf16.msra.mxu0 0
        %431 = vmatpush.bf16.msra.mxu0 0
        %432 = vmatpush.bf16.msra.mxu0 %v423
        %433 = vmatmul.bf16.gmra.mxu0 %v419
        %v434 = vpop.f32.mrf.mxu0
        %v435 = vadd.f32 0.0, %v434
        %v436 = vpop.f32.mrf.mxu0
        %437 = vdwg.mxu0
        %438 = vset.pattern.permute.xlu0 37
        %439 = vperm.xlu0 %438, %v353
        %v440 = vpop.permute.xlu0 %439
        %v442 = vperm.slane %v377, 1
        %v443 = vadd.f32 %v440, %v442
        %v444 = vsel %vm403, %v443, 0.0
        %v445 = vmul.f32 %v444, 0.2
        %v446 = vmax.f32 %v444, %v445
        %v447 = vsel %vm407, %v446, -inf
        %448 = vmax.xlane.f32.xlu0 %v447
        %v449 = vpop.xlane.xlu0 %448
        %v450 = vsub.f32 %v446, %v449
        %v451 = vmul.f32 %v450, 1.442695
        %v452 = vpow.pop %v451
        %v453 = vsel %vm407, %v452, 0.0
        %454 = vadd.xlane.f32.xlu0 %v453
        %v455 = vpop.xlane.xlu0 %454
        %v456 = vpack.c.bf16 %v452, %v452
        %v458 = vunpack.c.l.b16 %v356
        %v459 = vpack.c.b16 %v458, %v458
        %460 = vrot.lane.b32.xlu0 %v459, 120
        %v461 = vpop.permute.xlu0 %460
        %v463 = vsel %vm407, %v456, 0
        %v466 = vsel %vm421, %v461, 0
        %468 = vmatpush.bf16.msra.mxu0 0
        %469 = vmatpush.bf16.msra.mxu0 0
        %470 = vmatpush.bf16.msra.mxu0 0
        %471 = vmatpush.bf16.msra.mxu0 0
        %472 = vmatpush.bf16.msra.mxu0 0
        %473 = vmatpush.bf16.msra.mxu0 0
        %474 = vmatpush.bf16.msra.mxu0 0
        %475 = vmatpush.bf16.msra.mxu0 %v466
        %476 = vmatmul.bf16.gmra.mxu0 %v463
        %v477 = vpop.f32.mrf.mxu0
        %v478 = vadd.f32 0.0, %v477
        %v479 = vpop.f32.mrf.mxu0
        %480 = vdwg.mxu0
        %481 = vset.pattern.permute.xlu0 38
        %482 = vperm.xlu0 %481, %v353
        %v483 = vpop.permute.xlu0 %482
        %v485 = vperm.slane %v377, 2
        %v486 = vadd.f32 %v483, %v485
        %v487 = vsel %vm403, %v486, 0.0
        %v488 = vmul.f32 %v487, 0.2
        %v489 = vmax.f32 %v487, %v488
        %v490 = vsel %vm407, %v489, -inf
        %491 = vmax.xlane.f32.xlu0 %v490
        %v492 = vpop.xlane.xlu0 %491
        %v493 = vsub.f32 %v489, %v492
        %v494 = vmul.f32 %v493, 1.442695
        %v495 = vpow.pop %v494
        %v496 = vsel %vm407, %v495, 0.0
        %497 = vadd.xlane.f32.xlu0 %v496
        %v498 = vpop.xlane.xlu0 %497
        %v499 = vpack.c.bf16 %v495, %v495
        %500 = vrot.lane.b32.xlu0 %v459, 112
        %v501 = vpop.permute.xlu0 %500
        %v503 = vsel %vm407, %v499, 0
        %v506 = vsel %vm421, %v501, 0
        %508 = vmatpush.bf16.msra.mxu0 0
        %509 = vmatpush.bf16.msra.mxu0 0
        %510 = vmatpush.bf16.msra.mxu0 0
        %511 = vmatpush.bf16.msra.mxu0 0
        %512 = vmatpush.bf16.msra.mxu0 0
        %513 = vmatpush.bf16.msra.mxu0 0
        %514 = vmatpush.bf16.msra.mxu0 0
        %515 = vmatpush.bf16.msra.mxu0 %v506
        %516 = vmatmul.bf16.gmra.mxu0 %v503
        %v517 = vpop.f32.mrf.mxu0
        %v518 = vadd.f32 0.0, %v517
        %v519 = vpop.f32.mrf.mxu0
        %520 = vdwg.mxu0
        %521 = vset.pattern.permute.xlu0 39
        %522 = vperm.xlu0 %521, %v353
        %v523 = vpop.permute.xlu0 %522
        %v525 = vperm.slane %v377, 3
        %v526 = vadd.f32 %v523, %v525
        %v527 = vsel %vm403, %v526, 0.0
        %v528 = vmul.f32 %v527, 0.2
        %v529 = vmax.f32 %v527, %v528
        %v530 = vsel %vm407, %v529, -inf
        %531 = vmax.xlane.f32.xlu0 %v530
        %v532 = vpop.xlane.xlu0 %531
        %v533 = vsub.f32 %v529, %v532
        %v534 = vmul.f32 %v533, 1.442695
        %v535 = vpow.pop %v534
        %v536 = vsel %vm407, %v535, 0.0
        %537 = vadd.xlane.f32.xlu0 %v536
        %v538 = vpop.xlane.xlu0 %537
        %v539 = vpack.c.bf16 %v535, %v535
        %540 = vrot.lane.b32.xlu0 %v459, 104
        %v541 = vpop.permute.xlu0 %540
        %v543 = vsel %vm407, %v539, 0
        %v546 = vsel %vm421, %v541, 0
        %548 = vmatpush.bf16.msra.mxu0 0
        %549 = vmatpush.bf16.msra.mxu0 0
        %550 = vmatpush.bf16.msra.mxu0 0
        %551 = vmatpush.bf16.msra.mxu0 0
        %552 = vmatpush.bf16.msra.mxu0 0
        %553 = vmatpush.bf16.msra.mxu0 0
        %554 = vmatpush.bf16.msra.mxu0 0
        %555 = vmatpush.bf16.msra.mxu0 %v546
        %556 = vmatmul.bf16.gmra.mxu0 %v543
        %v557 = vpop.f32.mrf.mxu0
        %v558 = vadd.f32 0.0, %v557
        %v559 = vpop.f32.mrf.mxu0
        %560 = vdwg.mxu0
        %562 = vrot.lane.b32.xlu0 %v478, 8
        %v563 = vpop.permute.xlu0 %562
        %566 = vrot.lane.b32.xlu0 %v518, 16
        %v567 = vpop.permute.xlu0 %566
        %570 = vrot.lane.b32.xlu0 %v558, 24
        %v571 = vpop.permute.xlu0 %570
        %v573 = vsel %vm407, %v435, %v563
        %vm574 = vcmask 130048
        %v575 = vsel %vm574, %v573, %v567
        %vm576 = vcmask 195584
        %v577 = vsel %vm576, %v575, %v571
        %vm578 = vcmask 7168
        %v579 = vsel %vm578, %v416, %v455
        %vm580 = vcmask 15360
        %v581 = vsel %vm580, %v579, %v498
        %vm582 = vcmask 23552
        %v583 = vsel %vm582, %v581, %v538
        %v584 = vrcp.pop %v583
        %586 = vset.pattern.permute.xlu0 0
        %587 = vperm.xlu0 %586, %v584
        %v588 = vpop.permute.xlu0 %587
        %590 = vset.pattern.permute.xlu0 1
        %591 = vperm.xlu0 %590, %v584
        %v592 = vpop.permute.xlu0 %591
        %594 = vset.pattern.permute.xlu0 2
        %595 = vperm.xlu0 %594, %v584
        %v596 = vpop.permute.xlu0 %595
        %598 = vset.pattern.permute.xlu0 3
        %599 = vperm.xlu0 %598, %v584
        %v600 = vpop.permute.xlu0 %599
        %v602 = vsel %vm407, %v588, %v592
        %v603 = vsel %vm574, %v602, %v596
        %v604 = vsel %vm576, %v603, %v600
        %v605 = vmul.f32 %v577, %v604
        %v606 = vadd.f32 %v605, %v353
        %v607 = vld [vmem:[%s4] sm:$0x1]
        %v609 = vperm.slane %v607, 0
        %v611 = vadd.f32 %v606, %v609
        %612 = vst.msk [vmem:[%s313] sm:$0xff] %vm339, %v611
        %s613 = sand.u32 %s164, 1
        %s614 = scalar_lea.sflag [#allocation4], %s613
        %s615 = sand.u32 %s164, 1
        %s616 = smul.addr %s615, 8
        %s617 = scalar_lea.vmem [#allocation8], %s616
        // Predicated region
        $region53: #{tpu_custom_call.1} parent=39 // pred_check
          %p618 = pneg %p174
        $region54: #{tpu_custom_call.1} parent=39 // pred_check_branch
          %620 = sbr.rel (%p618) target = $region56
        $region55: #{tpu_custom_call.1} parent=39 // pred_region
          %622 = vsyncadd %s614, 0
          %s623 = sadd.s32 %s30, %s29
          %s624 = smul.addr %s623, 8
          %s625 = scalar_lea.hbm %s5, %s624
          %s627 = sshll.u32 %s617, 4
          %s628 = int_to_ptr.vmem [resolvable:$true] %s627
          %s629 = sshll.u32 %s625, 4
          %s630 = int_to_ptr.hbm [resolvable:$true] %s629
          %632 = dma.vmem_to_hbm [thread:$0]  %s628, 128, %s630, %s614
        $region56: #{tpu_custom_call.1} parent=39 // pred_fallthru
          _
      $region40: #{tpu_custom_call.1} parent=5 // pred_fallthru
        _
      %p633 = scmp.le.s32.totalorder 2, %s20
      // Predicated region
      $region57: #{tpu_custom_call.1} parent=5 // pred_check
        %p634 = pneg %p633
      $region58: #{tpu_custom_call.1} parent=5 // pred_check_branch
        %636 = sbr.rel (%p634) target = $region60
      $region59: #{tpu_custom_call.1} parent=5 // pred_region
        %s637 = ssub.s32 %s20, 2
        // Predicated region
        $region61: #{tpu_custom_call.1} parent=59 // pred_check
          %p638 = pneg %p180
        $region62: #{tpu_custom_call.1} parent=59 // pred_check_branch
          %640 = sbr.rel (%p638) target = $region64
        $region63: #{tpu_custom_call.1} parent=59 // pred_region
          %s641 = sand.u32 %s165, 1
          %s642 = scalar_lea.sflag [#allocation4], %s641
          %s643 = sand.u32 %s165, 1
          %s644 = smul.addr %s643, 8
          %s645 = scalar_lea.vmem [#allocation8], %s644
          %647 = dma.done %s642, 128
        $region64: #{tpu_custom_call.1} parent=59 // pred_fallthru
          _
      $region60: #{tpu_custom_call.1} parent=5 // pred_fallthru
        _
    $region6: #{tpu_custom_call.1} parent=1 // loop_footer
      %s24 = sadd.s32 1, %s20
    $region7: #{tpu_custom_call.1} parent=1 // loop_footer_branch
      %19 = sbr.rel target = $region3
    $region8: #{tpu_custom_call.1} parent=1 // loop_exit
      _
    %648 = vsyncpa [#allocation3], 1
    %s649 = scalar_lea.sflag [#allocation3], 1
    %650 = vsyncpa %s649, 1
    %651 = vsyncpa [#allocation6], 1
    %s652 = scalar_lea.sflag [#allocation6], 1
    %653 = vsyncpa %s652, 1
    %654 = vsyncpa [#allocation4], 1
    %s655 = scalar_lea.sflag [#allocation4], 1
    %656 = vsyncpa %s655, 1

</llo_original>
